<compile_context>
chip_gen: v5e
topology: v5e:2x2
jax: 0.10.0
libtpu: 0.0.40
codegen_flags: <defaults>
</compile_context>

<pallas_src>
import numpy as np
import jax
import jax.numpy as jnp
from jax.experimental import pallas as pl
from jax.experimental.pallas import tpu as pltpu

# ---------------- configuration (small synthetic shapes) ----------------
B, C, T, H, W = 2, 4, 2, 16, 16
PATCH = 8
TUB = 1
D = 32              # embed_dim (must be % 16 == 0 for 3d sincos pos-embed)
DEPTH = 2
NUM_HEADS = 4
MLP_RATIO = 4.0
EPS = 1e-6

HD = D // NUM_HEADS
SCALE = HD ** -0.5
HM = int(D * MLP_RATIO)
GRID_3D = (T // TUB, H // PATCH, W // PATCH)
LP = GRID_3D[0] * GRID_3D[1] * GRID_3D[2]   # number of patch tokens (8)
L = LP + 1                                   # + cls token (9)
LPAD = 16                                    # padded tokens per sample (mult of 8)
NT = B * LPAD                                # stacked token rows across batch
P = C * TUB * PATCH * PATCH                  # flattened patch length (256)
OUT_ROWS = 8                                 # padded output rows  (>= B, mult of 8)
OUT_LANES = 128                              # padded output lanes (>= D, mult of 128)
NEG_INF = -1e30

# packed per-layer small-parameter slab: (DEPTH, NSLAB, SLAB_W) f32
SLAB_W = HM
NSLAB = 16
(ROW_LN1W, ROW_LN1B, ROW_QKVB, ROW_APB, ROW_LN2W, ROW_LN2B,
 ROW_FC1B, ROW_FC2B, ROW_NORMW, ROW_NORMB) = range(10)
assert SLAB_W >= 3 * D and SLAB_W >= HM and NSLAB >= 10


# ---------------- sincos positional embedding (same as the PyTorch code) ----
def get_1d_sincos_pos_embed_from_grid(embed_dim, pos):
    assert embed_dim % 2 == 0
    omega = np.arange(embed_dim // 2, dtype=np.float32)
    omega /= embed_dim / 2.0
    omega = 1.0 / 10000 ** omega
    pos = pos.reshape(-1)
    out = np.einsum('m,d->md', pos, omega)
    emb_sin = np.sin(out)
    emb_cos = np.cos(out)
    return np.concatenate([emb_sin, emb_cos], axis=1)


def get_3d_sincos_pos_embed(embed_dim, grid_size, cls_token=False):
    assert embed_dim % 16 == 0
    t_size, h_size, w_size = grid_size
    w_embed_dim = embed_dim // 16 * 6
    h_embed_dim = embed_dim // 16 * 6
    t_embed_dim = embed_dim // 16 * 4
    w_pos = get_1d_sincos_pos_embed_from_grid(w_embed_dim, np.arange(w_size))
    h_pos = get_1d_sincos_pos_embed_from_grid(h_embed_dim, np.arange(h_size))
    t_pos = get_1d_sincos_pos_embed_from_grid(t_embed_dim, np.arange(t_size))
    w_pos = np.tile(w_pos, (t_size * h_size, 1))
    h_pos = np.tile(np.repeat(h_pos, w_size, axis=0), (t_size, 1))
    t_pos = np.repeat(t_pos, h_size * w_size, axis=0)
    pos_embed = np.concatenate((w_pos, h_pos, t_pos), axis=1)
    if cls_token:
        pos_embed = np.concatenate([np.zeros([1, embed_dim]), pos_embed], axis=0)
    return pos_embed


# ---------------- JAX glue: NCTHW -> (B, LP, P) patches ---------------------
def to_patches(x):
    b, c, t, h, w = x.shape
    tg, hg, wg = t // TUB, h // PATCH, w // PATCH
    x = x.reshape(b, c, tg, TUB, hg, PATCH, wg, PATCH)
    # -> (b, t, h, w, c, tub, ph, pw): token order (t,h,w), vector (c,tub,ph,pw)
    x = x.transpose(0, 2, 4, 6, 1, 3, 5, 7)
    return x.reshape(b, tg * hg * wg, c * TUB * PATCH * PATCH)


def _layernorm(v, w, b):
    # single-pass: one sum and one sum-of-squares instead of two passes
    n = v.shape[-1]
    s1 = jnp.sum(v, axis=-1, keepdims=True)
    s2 = jnp.sum(v * v, axis=-1, keepdims=True)
    mu = s1 * (1.0 / n)
    var = s2 * (1.0 / n) - mu * mu
    return (v - mu) * jax.lax.rsqrt(var + EPS) * w + b


# ---------------- the Pallas kernel -----------------------------------------
def vit_kernel(patches_ref, projw_ref, add_ref, bias_ref, slab_ref,
               qkvw_ref, apw_ref, fc1w_ref, fc2w_ref, out_ref):
    f32 = jnp.float32
    bf16 = jnp.bfloat16

    # Patch embedding: Conv3d with kernel==stride is exactly a matmul.
    # `add_ref` bakes proj_bias + pos_embed (and the cls token at its row).
    x = jnp.dot(patches_ref[...], projw_ref[...],
                preferred_element_type=f32) + add_ref[...]              # (NT, D)
    attn_bias = bias_ref[...]                                           # (NT, NT)

    for d in range(DEPTH):   # DEPTH is tiny -> static unroll is fine here.
        vs = slab_ref[d]     # (NSLAB, SLAB_W) packed per-layer small params
        ln1w = vs[ROW_LN1W:ROW_LN1W + 1, :D]
        ln1b = vs[ROW_LN1B:ROW_LN1B + 1, :D]
        qkvb = vs[ROW_QKVB:ROW_QKVB + 1, :3 * D]
        apb = vs[ROW_APB:ROW_APB + 1, :D]
        ln2w = vs[ROW_LN2W:ROW_LN2W + 1, :D]
        ln2b = vs[ROW_LN2B:ROW_LN2B + 1, :D]
        fc1b = vs[ROW_FC1B:ROW_FC1B + 1, :HM]
        fc2b = vs[ROW_FC2B:ROW_FC2B + 1, :D]

        # ---------------- attention ----------------
        h = _layernorm(x, ln1w, ln1b).astype(bf16)                      # (NT, D)
        # fused QKV projection: one MXU push; scale pre-folded into Q part
        qkv = jnp.dot(h, qkvw_ref[d],
                      preferred_element_type=f32) + qkvb                # (NT, 3D)

        head_outs = []
        for hh in range(NUM_HEADS):          # heads via static lane slices
            q = qkv[:, hh * HD:(hh + 1) * HD].astype(bf16)
            k = qkv[:, D + hh * HD:D + (hh + 1) * HD].astype(bf16)
            v = qkv[:, 2 * D + hh * HD:2 * D + (hh + 1) * HD].astype(bf16)
            s = jnp.einsum('nd,md->nm', q, k,
                           preferred_element_type=f32) + attn_bias      # (NT, NT)
            s = s - jnp.max(s, axis=-1, keepdims=True)
            e = jnp.exp(s)
            l = jnp.sum(e, axis=-1, keepdims=True)
            # normalise after the PV matmul; divide -> EUP approx reciprocal
            o = jnp.dot(e.astype(bf16), v, preferred_element_type=f32)  # (NT, HD)
            head_outs.append(o * pl.reciprocal(l, approx=True))

        o_cat = jnp.concatenate(head_outs, axis=-1).astype(bf16)        # (NT, D)
        # single output projection == concat(heads) @ Wproj
        x = x + jnp.dot(o_cat, apw_ref[d], preferred_element_type=f32) + apb

        # ---------------- MLP ----------------
        h2 = _layernorm(x, ln2w, ln2b).astype(bf16)
        m = jnp.dot(h2, fc1w_ref[d], preferred_element_type=f32) + fc1b
        # TODO(synk): torch nn.GELU defaults to exact erf GELU; tanh approx used.
        m = jax.nn.gelu(m, approximate=True)
        m = jnp.dot(m.astype(bf16), fc2w_ref[d],
                    preferred_element_type=f32) + fc2b
        x = x + m

    # Final LayerNorm + mean over patch (non-cls) tokens: per-sample f32
    # sublane-sum reduce, written into a lane-dense (8, 128) output slab.
    vs0 = slab_ref[0]
    xf = _layernorm(x, vs0[ROW_NORMW:ROW_NORMW + 1, :D],
                    vs0[ROW_NORMB:ROW_NORMB + 1, :D])
    out_ref[...] = jnp.zeros((OUT_ROWS, OUT_LANES), f32)
    for b in range(B):
        seg = xf[b * LPAD:b * LPAD + LP, :]                             # (LP, D)
        prow = jnp.sum(seg, axis=0, keepdims=True) * (1.0 / LP)         # (1, D)
        prow = jnp.concatenate(
            [prow, jnp.zeros((1, OUT_LANES - D), f32)], axis=-1)        # (1, 128)
        out_ref[b:b + 1, :] = prow


# ---------------- wrapper: one-time weight transforms + pallas_call ---------
def _prepare_kernel_args(x, p):
    bf16 = jnp.bfloat16
    f32 = jnp.float32

    # activations: zero-padded, batch-stacked patch rows (bf16 wrapper-side)
    patches = to_patches(x)                                            # (B,LP,P)
    patches = jnp.concatenate(
        [patches, jnp.zeros((B, LPAD - LP, P), f32)], axis=1)          # (B,LPAD,P)
    patches = patches.reshape(NT, P).astype(bf16)

    # additive table: proj bias + pos embed (patch rows), cls token (row LP)
    add_rows = jnp.concatenate([
        p['proj_b'] + p['pos'][1:],                 # patch rows 0..LP-1
        p['cls'] + p['pos'][:1],                    # cls row LP
        jnp.zeros((LPAD - L, D), f32),              # padding rows
    ], axis=0)                                      # (LPAD, D)
    add_full = jnp.tile(add_rows, (B, 1))           # (NT, D)

    # constant block-diagonal attention bias (numpy -> constant under jit)
    tok = np.arange(NT)
    same = (tok[:, None] // LPAD) == (tok[None, :] // LPAD)
    valid = (tok[None, :] % LPAD) < L               # patches + cls are valid keys
    attn_bias = jnp.asarray(np.where(same & valid, 0.0, NEG_INF), f32)

    # fused QKV weights / bias; attention scale folded into the Q columns
    qkv_w, qkv_b = p['qkv_w'], p['qkv_b']
    qkvw = jnp.concatenate([qkv_w[:, :, :D] * SCALE, qkv_w[:, :, D:]],
                           axis=-1).astype(bf16)                       # (DEPTH,D,3D)
    qkvb = jnp.concatenate([qkv_b[:, :, :D] * SCALE, qkv_b[:, :, D:]],
                           axis=-1)                                    # (DEPTH,1,3D)

    # pack all small per-layer params into one f32 slab (DEPTH, NSLAB, SLAB_W)
    def pad_row(vec):
        w = vec.shape[-1]
        if w == SLAB_W:
            return vec
        return jnp.concatenate([vec, jnp.zeros((1, SLAB_W - w), f32)], axis=-1)

    slabs = []
    for d in range(DEPTH):
        rows = [pad_row(p['ln1_w'][d]), pad_row(p['ln1_b'][d]),
                pad_row(qkvb[d]),
                pad_row(p['ap_b'][d]),
                pad_row(p['ln2_w'][d]), pad_row(p['ln2_b'][d]),
                pad_row(p['fc1_b'][d]),
                pad_row(p['fc2_b'][d]),
                pad_row(p['norm_w']), pad_row(p['norm_b'])]
        rows += [jnp.zeros((1, SLAB_W), f32)] * (NSLAB - len(rows))
        slabs.append(jnp.concatenate(rows, axis=0)[None])
    slab = jnp.concatenate(slabs, axis=0)                              # (DEPTH,NSLAB,SLAB_W)

    return (patches, p['proj_w'].astype(bf16), add_full, attn_bias, slab,
            qkvw, p['ap_w'].astype(bf16),
            p['fc1_w'].astype(bf16), p['fc2_w'].astype(bf16))


@jax.jit
def prithvi_vit_forward(x, params):
    args = _prepare_kernel_args(x, params)
    vmem = pltpu.MemorySpace.VMEM
    # Single invocation: whole (tiny) problem resident in VMEM.
    out = pl.pallas_call(
        vit_kernel,
        out_shape=jax.ShapeDtypeStruct((OUT_ROWS, OUT_LANES), jnp.float32),
        in_specs=[pl.BlockSpec(memory_space=vmem) for _ in args],
        out_specs=pl.BlockSpec(memory_space=vmem),
    )(*args)
    return out[:B, :D]


# ---------------- deterministic parameter initialization --------------------
def xavier_uniform(key, shape):
    fan_in, fan_out = shape[-2], shape[-1]
    lim = float(np.sqrt(6.0 / (fan_in + fan_out)))
    return jax.random.uniform(key, shape, jnp.float32, -lim, lim)


def init_params(key):
    ks = jax.random.split(key, 8)
    params = {}
    params['proj_w'] = xavier_uniform(ks[0], (P, D))
    params['proj_b'] = jax.random.uniform(ks[1], (1, D), jnp.float32,
                                          -1.0 / np.sqrt(P), 1.0 / np.sqrt(P))
    params['cls'] = 0.02 * jax.random.normal(ks[2], (1, D), jnp.float32)
    pos = get_3d_sincos_pos_embed(D, GRID_3D, cls_token=True)
    params['pos'] = jnp.asarray(pos, jnp.float32)             # (L, D)

    params['ln1_w'] = jnp.ones((DEPTH, 1, D), jnp.float32)
    params['ln1_b'] = jnp.zeros((DEPTH, 1, D), jnp.float32)
    params['qkv_w'] = xavier_uniform(ks[3], (DEPTH, D, 3 * D))
    params['qkv_b'] = jnp.zeros((DEPTH, 1, 3 * D), jnp.float32)
    params['ap_w'] = xavier_uniform(ks[4], (DEPTH, D, D))
    params['ap_b'] = jnp.zeros((DEPTH, 1, D), jnp.float32)
    params['ln2_w'] = jnp.ones((DEPTH, 1, D), jnp.float32)
    params['ln2_b'] = jnp.zeros((DEPTH, 1, D), jnp.float32)
    params['fc1_w'] = xavier_uniform(ks[5], (DEPTH, D, HM))
    params['fc1_b'] = jnp.zeros((DEPTH, 1, HM), jnp.float32)
    params['fc2_w'] = xavier_uniform(ks[6], (DEPTH, HM, D))
    params['fc2_b'] = jnp.zeros((DEPTH, 1, D), jnp.float32)
    params['norm_w'] = jnp.ones((1, D), jnp.float32)
    params['norm_b'] = jnp.zeros((1, D), jnp.float32)
    return params


# ---------------- pure-JAX reference (module layout, mirrored numerics) -----
def ref_forward(x, p):
    bf16 = jnp.bfloat16
    f32 = jnp.float32
    patches = to_patches(x)                                            # (B,LP,P)
    xe = jnp.einsum('blp,pd->bld', patches.astype(bf16),
                    p['proj_w'].astype(bf16),
                    preferred_element_type=f32) + p['proj_b']
    xe = xe + p['pos'][None, 1:, :]
    cls = p['cls'] + p['pos'][:1, :]
    xx = jnp.concatenate([jnp.broadcast_to(cls[None], (B, 1, D)), xe], axis=1)

    for d in range(DEPTH):
        h = _layernorm(xx, p['ln1_w'][d], p['ln1_b'][d]).astype(bf16)
        wq = (p['qkv_w'][d, :, :D] * SCALE).astype(bf16)
        wk = p['qkv_w'][d, :, D:2 * D].astype(bf16)
        wv = p['qkv_w'][d, :, 2 * D:].astype(bf16)
        q = jnp.einsum('bld,de->ble', h, wq,
                       preferred_element_type=f32) + p['qkv_b'][d, :, :D] * SCALE
        k = jnp.einsum('bld,de->ble', h, wk,
                       preferred_element_type=f32) + p['qkv_b'][d, :, D:2 * D]
        v = jnp.einsum('bld,de->ble', h, wv,
                       preferred_element_type=f32) + p['qkv_b'][d, :, 2 * D:]
        q = q.reshape(B, L, NUM_HEADS, HD).transpose(0, 2, 1, 3)
        k = k.reshape(B, L, NUM_HEADS, HD).transpose(0, 2, 1, 3)
        v = v.reshape(B, L, NUM_HEADS, HD).transpose(0, 2, 1, 3)
        att = jnp.einsum('bhld,bhmd->bhlm', q.astype(bf16), k.astype(bf16),
                         preferred_element_type=f32)
        att = jax.nn.softmax(att, axis=-1)
        o = jnp.einsum('bhlm,bhmd->bhld', att.astype(bf16), v.astype(bf16),
                       preferred_element_type=f32)
        o = o.transpose(0, 2, 1, 3).reshape(B, L, D)
        o = jnp.einsum('bld,de->ble', o.astype(bf16), p['ap_w'][d].astype(bf16),
                       preferred_element_type=f32) + p['ap_b'][d]
        xx = xx + o
        h2 = _layernorm(xx, p['ln2_w'][d], p['ln2_b'][d])
        m = jnp.einsum('bld,de->ble', h2.astype(bf16), p['fc1_w'][d].astype(bf16),
                       preferred_element_type=f32) + p['fc1_b'][d]
        m = jax.nn.gelu(m, approximate=True)
        m = jnp.einsum('bld,de->ble', m.astype(bf16), p['fc2_w'][d].astype(bf16),
                       preferred_element_type=f32) + p['fc2_b'][d]
        xx = xx + m

    xx = _layernorm(xx, p['norm_w'], p['norm_b'])
    return xx[:, 1:].mean(axis=1)


if __name__ == "__main__":
    key = jax.random.PRNGKey(0)
    kx, kp = jax.random.split(key)
    x = jax.random.normal(kx, (B, C, T, H, W), jnp.float32)
    params = init_params(kp)

    out = jax.block_until_ready(prithvi_vit_forward(x, params))
    ref = jax.block_until_ready(ref_forward(x, params))

    # bf16 matmuls + approx reciprocal dominate the tolerance budget.
    np.testing.assert_allclose(np.asarray(out), np.asarray(ref),
                               rtol=5e-3, atol=5e-3)
    assert out.shape == (B, D)
    print("KERNEL_OK")
</pallas_src>

<mosaic_0001>
module attributes {stable_mosaic.version = 11 : i64} {
  func.func @vit_kernel(%arg0: memref<32x256xbf16, #tpu.memory_space<vmem>>, %arg1: memref<256x32xbf16, #tpu.memory_space<vmem>>, %arg2: memref<32x32xf32, #tpu.memory_space<vmem>>, %arg3: memref<32x32xf32, #tpu.memory_space<vmem>>, %arg4: memref<2x16x128xf32, #tpu.memory_space<vmem>>, %arg5: memref<2x32x96xbf16, #tpu.memory_space<vmem>>, %arg6: memref<2x32x32xbf16, #tpu.memory_space<vmem>>, %arg7: memref<2x32x128xbf16, #tpu.memory_space<vmem>>, %arg8: memref<2x128x32xbf16, #tpu.memory_space<vmem>>, %arg9: memref<8x128xf32, #tpu.memory_space<vmem>>) attributes {dimension_semantics = [], scalar_prefetch = 0 : i64, scratch_operands = 0 : i64, tpu.core_type = #tpu.core_type<tc>} {
    %c0 = arith.constant 0 : index
    %c0_0 = arith.constant 0 : index
    %0 = vector.load %arg0[%c0, %c0_0] : memref<32x256xbf16, #tpu.memory_space<vmem>>, vector<32x256xbf16>
    %c0_1 = arith.constant 0 : index
    %c0_2 = arith.constant 0 : index
    %1 = vector.load %arg1[%c0_1, %c0_2] : memref<256x32xbf16, #tpu.memory_space<vmem>>, vector<256x32xbf16>
    %cst = arith.constant dense<0.000000e+00> : vector<32x32xf32>
    %2 = tpu.matmul %0, %1, %cst {dimension_numbers = #tpu.dot_dimension_numbers<[1], [0], [0], [1], [0, 0, 1, 1], [], []>} : vector<32x256xbf16>, vector<256x32xbf16>, vector<32x32xf32> -> vector<32x32xf32>
    %c0_3 = arith.constant 0 : index
    %c0_4 = arith.constant 0 : index
    %3 = vector.load %arg2[%c0_3, %c0_4] : memref<32x32xf32, #tpu.memory_space<vmem>>, vector<32x32xf32>
    %4 = arith.addf %2, %3 : vector<32x32xf32>
    %c0_5 = arith.constant 0 : index
    %c0_6 = arith.constant 0 : index
    %5 = vector.load %arg3[%c0_5, %c0_6] : memref<32x32xf32, #tpu.memory_space<vmem>>, vector<32x32xf32>
    %c0_7 = arith.constant 0 : index
    %c0_8 = arith.constant 0 : index
    %c0_9 = arith.constant 0 : index
    %6 = vector.load %arg4[%c0_7, %c0_8, %c0_9] : memref<2x16x128xf32, #tpu.memory_space<vmem>>, vector<1x16x128xf32>
    %7 = vector.shape_cast %6 : vector<1x16x128xf32> to vector<16x128xf32>
    %8 = vector.extract_strided_slice %7 {offsets = [0, 0], sizes = [1, 32], strides = [1, 1]} : vector<16x128xf32> to vector<1x32xf32>
    %9 = vector.extract_strided_slice %7 {offsets = [1, 0], sizes = [1, 32], strides = [1, 1]} : vector<16x128xf32> to vector<1x32xf32>
    %10 = vector.extract_strided_slice %7 {offsets = [2, 0], sizes = [1, 96], strides = [1, 1]} : vector<16x128xf32> to vector<1x96xf32>
    %11 = vector.extract_strided_slice %7 {offsets = [3, 0], sizes = [1, 32], strides = [1, 1]} : vector<16x128xf32> to vector<1x32xf32>
    %12 = vector.extract_strided_slice %7 {offsets = [4, 0], sizes = [1, 32], strides = [1, 1]} : vector<16x128xf32> to vector<1x32xf32>
    %13 = vector.extract_strided_slice %7 {offsets = [5, 0], sizes = [1, 32], strides = [1, 1]} : vector<16x128xf32> to vector<1x32xf32>
    %14 = vector.extract_strided_slice %7 {offsets = [6, 0], sizes = [1, 128], strides = [1, 1]} : vector<16x128xf32> to vector<1x128xf32>
    %15 = vector.extract_strided_slice %7 {offsets = [7, 0], sizes = [1, 32], strides = [1, 1]} : vector<16x128xf32> to vector<1x32xf32>
    %cst_10 = arith.constant dense<0.000000e+00> : vector<32xf32>
    %16 = vector.multi_reduction <add>, %4, %cst_10 [1] : vector<32x32xf32> to vector<32xf32>
    %17 = vector.shape_cast %16 : vector<32xf32> to vector<32x1xf32>
    %18 = arith.mulf %4, %4 : vector<32x32xf32>
    %cst_11 = arith.constant dense<0.000000e+00> : vector<32xf32>
    %19 = vector.multi_reduction <add>, %18, %cst_11 [1] : vector<32x32xf32> to vector<32xf32>
    %20 = vector.shape_cast %19 : vector<32xf32> to vector<32x1xf32>
    %cst_12 = arith.constant 3.125000e-02 : f32
    %21 = vector.broadcast %cst_12 : f32 to vector<32x1xf32>
    %22 = arith.mulf %17, %21 : vector<32x1xf32>
    %cst_13 = arith.constant 3.125000e-02 : f32
    %23 = vector.broadcast %cst_13 : f32 to vector<32x1xf32>
    %24 = arith.mulf %20, %23 : vector<32x1xf32>
    %25 = arith.mulf %22, %22 : vector<32x1xf32>
    %26 = arith.subf %24, %25 : vector<32x1xf32>
    %27 = vector.broadcast %22 : vector<32x1xf32> to vector<32x32xf32>
    %28 = arith.subf %4, %27 : vector<32x32xf32>
    %cst_14 = arith.constant 9.99999997E-7 : f32
    %29 = vector.broadcast %cst_14 : f32 to vector<32x1xf32>
    %30 = arith.addf %26, %29 : vector<32x1xf32>
    %31 = math.rsqrt %30 : vector<32x1xf32>
    %32 = vector.broadcast %31 : vector<32x1xf32> to vector<32x32xf32>
    %33 = arith.mulf %28, %32 : vector<32x32xf32>
    %34 = vector.broadcast %8 : vector<1x32xf32> to vector<32x32xf32>
    %35 = arith.mulf %33, %34 : vector<32x32xf32>
    %36 = vector.broadcast %9 : vector<1x32xf32> to vector<32x32xf32>
    %37 = arith.addf %35, %36 : vector<32x32xf32>
    %38 = arith.truncf %37 : vector<32x32xf32> to vector<32x32xbf16>
    %c0_15 = arith.constant 0 : index
    %c0_16 = arith.constant 0 : index
    %c0_17 = arith.constant 0 : index
    %39 = vector.load %arg5[%c0_15, %c0_16, %c0_17] : memref<2x32x96xbf16, #tpu.memory_space<vmem>>, vector<1x32x96xbf16>
    %40 = vector.shape_cast %39 : vector<1x32x96xbf16> to vector<32x96xbf16>
    %cst_18 = arith.constant dense<0.000000e+00> : vector<32x96xf32>
    %41 = tpu.matmul %38, %40, %cst_18 {dimension_numbers = #tpu.dot_dimension_numbers<[1], [0], [0], [1], [0, 0, 1, 1], [], []>} : vector<32x32xbf16>, vector<32x96xbf16>, vector<32x96xf32> -> vector<32x96xf32>
    %42 = vector.broadcast %10 : vector<1x96xf32> to vector<32x96xf32>
    %43 = arith.addf %41, %42 : vector<32x96xf32>
    %44 = vector.extract_strided_slice %43 {offsets = [0, 0], sizes = [32, 8], strides = [1, 1]} : vector<32x96xf32> to vector<32x8xf32>
    %45 = arith.truncf %44 : vector<32x8xf32> to vector<32x8xbf16>
    %46 = vector.extract_strided_slice %43 {offsets = [0, 32], sizes = [32, 8], strides = [1, 1]} : vector<32x96xf32> to vector<32x8xf32>
    %47 = arith.truncf %46 : vector<32x8xf32> to vector<32x8xbf16>
    %48 = vector.extract_strided_slice %43 {offsets = [0, 64], sizes = [32, 8], strides = [1, 1]} : vector<32x96xf32> to vector<32x8xf32>
    %49 = arith.truncf %48 : vector<32x8xf32> to vector<32x8xbf16>
    "tpu.trace_start"() <{level = 10 : i32, message = "nd,md->nm"}> : () -> ()
    %cst_19 = arith.constant dense<0.000000e+00> : vector<32x32xf32>
    %50 = tpu.matmul %45, %47, %cst_19 {dimension_numbers = #tpu.dot_dimension_numbers<[1], [1], [0], [0], [0, 0, 1, 0], [], []>} : vector<32x8xbf16>, vector<32x8xbf16>, vector<32x32xf32> -> vector<32x32xf32>
    "tpu.trace_stop"() : () -> ()
    %51 = arith.addf %50, %5 : vector<32x32xf32>
    %cst_20 = arith.constant dense<0xFF800000> : vector<32xf32>
    %52 = vector.multi_reduction <maximumf>, %51, %cst_20 [1] : vector<32x32xf32> to vector<32xf32>
    %53 = vector.shape_cast %52 : vector<32xf32> to vector<32x1xf32>
    %54 = vector.broadcast %53 : vector<32x1xf32> to vector<32x32xf32>
    %55 = arith.subf %51, %54 : vector<32x32xf32>
    %56 = math.exp %55 : vector<32x32xf32>
    %cst_21 = arith.constant dense<0.000000e+00> : vector<32xf32>
    %57 = vector.multi_reduction <add>, %56, %cst_21 [1] : vector<32x32xf32> to vector<32xf32>
    %58 = vector.shape_cast %57 : vector<32xf32> to vector<32x1xf32>
    %59 = arith.truncf %56 : vector<32x32xf32> to vector<32x32xbf16>
    %cst_22 = arith.constant dense<0.000000e+00> : vector<32x8xf32>
    %60 = tpu.matmul %59, %49, %cst_22 {dimension_numbers = #tpu.dot_dimension_numbers<[1], [0], [0], [1], [0, 0, 1, 1], [], []>} : vector<32x32xbf16>, vector<32x8xbf16>, vector<32x8xf32> -> vector<32x8xf32>
    %61 = tpu.reciprocal %58 {approx = true} : vector<32x1xf32> -> vector<32x1xf32>
    %62 = vector.broadcast %61 : vector<32x1xf32> to vector<32x8xf32>
    %63 = arith.mulf %60, %62 : vector<32x8xf32>
    %64 = vector.extract_strided_slice %43 {offsets = [0, 8], sizes = [32, 8], strides = [1, 1]} : vector<32x96xf32> to vector<32x8xf32>
    %65 = arith.truncf %64 : vector<32x8xf32> to vector<32x8xbf16>
    %66 = vector.extract_strided_slice %43 {offsets = [0, 40], sizes = [32, 8], strides = [1, 1]} : vector<32x96xf32> to vector<32x8xf32>
    %67 = arith.truncf %66 : vector<32x8xf32> to vector<32x8xbf16>
    %68 = vector.extract_strided_slice %43 {offsets = [0, 72], sizes = [32, 8], strides = [1, 1]} : vector<32x96xf32> to vector<32x8xf32>
    %69 = arith.truncf %68 : vector<32x8xf32> to vector<32x8xbf16>
    "tpu.trace_start"() <{level = 10 : i32, message = "nd,md->nm"}> : () -> ()
    %cst_23 = arith.constant dense<0.000000e+00> : vector<32x32xf32>
    %70 = tpu.matmul %65, %67, %cst_23 {dimension_numbers = #tpu.dot_dimension_numbers<[1], [1], [0], [0], [0, 0, 1, 0], [], []>} : vector<32x8xbf16>, vector<32x8xbf16>, vector<32x32xf32> -> vector<32x32xf32>
    "tpu.trace_stop"() : () -> ()
    %71 = arith.addf %70, %5 : vector<32x32xf32>
    %cst_24 = arith.constant dense<0xFF800000> : vector<32xf32>
    %72 = vector.multi_reduction <maximumf>, %71, %cst_24 [1] : vector<32x32xf32> to vector<32xf32>
    %73 = vector.shape_cast %72 : vector<32xf32> to vector<32x1xf32>
    %74 = vector.broadcast %73 : vector<32x1xf32> to vector<32x32xf32>
    %75 = arith.subf %71, %74 : vector<32x32xf32>
    %76 = math.exp %75 : vector<32x32xf32>
    %cst_25 = arith.constant dense<0.000000e+00> : vector<32xf32>
    %77 = vector.multi_reduction <add>, %76, %cst_25 [1] : vector<32x32xf32> to vector<32xf32>
    %78 = vector.shape_cast %77 : vector<32xf32> to vector<32x1xf32>
    %79 = arith.truncf %76 : vector<32x32xf32> to vector<32x32xbf16>
    %cst_26 = arith.constant dense<0.000000e+00> : vector<32x8xf32>
    %80 = tpu.matmul %79, %69, %cst_26 {dimension_numbers = #tpu.dot_dimension_numbers<[1], [0], [0], [1], [0, 0, 1, 1], [], []>} : vector<32x32xbf16>, vector<32x8xbf16>, vector<32x8xf32> -> vector<32x8xf32>
    %81 = tpu.reciprocal %78 {approx = true} : vector<32x1xf32> -> vector<32x1xf32>
    %82 = vector.broadcast %81 : vector<32x1xf32> to vector<32x8xf32>
    %83 = arith.mulf %80, %82 : vector<32x8xf32>
    %84 = vector.extract_strided_slice %43 {offsets = [0, 16], sizes = [32, 8], strides = [1, 1]} : vector<32x96xf32> to vector<32x8xf32>
    %85 = arith.truncf %84 : vector<32x8xf32> to vector<32x8xbf16>
    %86 = vector.extract_strided_slice %43 {offsets = [0, 48], sizes = [32, 8], strides = [1, 1]} : vector<32x96xf32> to vector<32x8xf32>
    %87 = arith.truncf %86 : vector<32x8xf32> to vector<32x8xbf16>
    %88 = vector.extract_strided_slice %43 {offsets = [0, 80], sizes = [32, 8], strides = [1, 1]} : vector<32x96xf32> to vector<32x8xf32>
    %89 = arith.truncf %88 : vector<32x8xf32> to vector<32x8xbf16>
    "tpu.trace_start"() <{level = 10 : i32, message = "nd,md->nm"}> : () -> ()
    %cst_27 = arith.constant dense<0.000000e+00> : vector<32x32xf32>
    %90 = tpu.matmul %85, %87, %cst_27 {dimension_numbers = #tpu.dot_dimension_numbers<[1], [1], [0], [0], [0, 0, 1, 0], [], []>} : vector<32x8xbf16>, vector<32x8xbf16>, vector<32x32xf32> -> vector<32x32xf32>
    "tpu.trace_stop"() : () -> ()
    %91 = arith.addf %90, %5 : vector<32x32xf32>
    %cst_28 = arith.constant dense<0xFF800000> : vector<32xf32>
    %92 = vector.multi_reduction <maximumf>, %91, %cst_28 [1] : vector<32x32xf32> to vector<32xf32>
    %93 = vector.shape_cast %92 : vector<32xf32> to vector<32x1xf32>
    %94 = vector.broadcast %93 : vector<32x1xf32> to vector<32x32xf32>
    %95 = arith.subf %91, %94 : vector<32x32xf32>
    %96 = math.exp %95 : vector<32x32xf32>
    %cst_29 = arith.constant dense<0.000000e+00> : vector<32xf32>
    %97 = vector.multi_reduction <add>, %96, %cst_29 [1] : vector<32x32xf32> to vector<32xf32>
    %98 = vector.shape_cast %97 : vector<32xf32> to vector<32x1xf32>
    %99 = arith.truncf %96 : vector<32x32xf32> to vector<32x32xbf16>
    %cst_30 = arith.constant dense<0.000000e+00> : vector<32x8xf32>
    %100 = tpu.matmul %99, %89, %cst_30 {dimension_numbers = #tpu.dot_dimension_numbers<[1], [0], [0], [1], [0, 0, 1, 1], [], []>} : vector<32x32xbf16>, vector<32x8xbf16>, vector<32x8xf32> -> vector<32x8xf32>
    %101 = tpu.reciprocal %98 {approx = true} : vector<32x1xf32> -> vector<32x1xf32>
    %102 = vector.broadcast %101 : vector<32x1xf32> to vector<32x8xf32>
    %103 = arith.mulf %100, %102 : vector<32x8xf32>
    %104 = vector.extract_strided_slice %43 {offsets = [0, 24], sizes = [32, 8], strides = [1, 1]} : vector<32x96xf32> to vector<32x8xf32>
    %105 = arith.truncf %104 : vector<32x8xf32> to vector<32x8xbf16>
    %106 = vector.extract_strided_slice %43 {offsets = [0, 56], sizes = [32, 8], strides = [1, 1]} : vector<32x96xf32> to vector<32x8xf32>
    %107 = arith.truncf %106 : vector<32x8xf32> to vector<32x8xbf16>
    %108 = vector.extract_strided_slice %43 {offsets = [0, 88], sizes = [32, 8], strides = [1, 1]} : vector<32x96xf32> to vector<32x8xf32>
    %109 = arith.truncf %108 : vector<32x8xf32> to vector<32x8xbf16>
    "tpu.trace_start"() <{level = 10 : i32, message = "nd,md->nm"}> : () -> ()
    %cst_31 = arith.constant dense<0.000000e+00> : vector<32x32xf32>
    %110 = tpu.matmul %105, %107, %cst_31 {dimension_numbers = #tpu.dot_dimension_numbers<[1], [1], [0], [0], [0, 0, 1, 0], [], []>} : vector<32x8xbf16>, vector<32x8xbf16>, vector<32x32xf32> -> vector<32x32xf32>
    "tpu.trace_stop"() : () -> ()
    %111 = arith.addf %110, %5 : vector<32x32xf32>
    %cst_32 = arith.constant dense<0xFF800000> : vector<32xf32>
    %112 = vector.multi_reduction <maximumf>, %111, %cst_32 [1] : vector<32x32xf32> to vector<32xf32>
    %113 = vector.shape_cast %112 : vector<32xf32> to vector<32x1xf32>
    %114 = vector.broadcast %113 : vector<32x1xf32> to vector<32x32xf32>
    %115 = arith.subf %111, %114 : vector<32x32xf32>
    %116 = math.exp %115 : vector<32x32xf32>
    %cst_33 = arith.constant dense<0.000000e+00> : vector<32xf32>
    %117 = vector.multi_reduction <add>, %116, %cst_33 [1] : vector<32x32xf32> to vector<32xf32>
    %118 = vector.shape_cast %117 : vector<32xf32> to vector<32x1xf32>
    %119 = arith.truncf %116 : vector<32x32xf32> to vector<32x32xbf16>
    %cst_34 = arith.constant dense<0.000000e+00> : vector<32x8xf32>
    %120 = tpu.matmul %119, %109, %cst_34 {dimension_numbers = #tpu.dot_dimension_numbers<[1], [0], [0], [1], [0, 0, 1, 1], [], []>} : vector<32x32xbf16>, vector<32x8xbf16>, vector<32x8xf32> -> vector<32x8xf32>
    %121 = tpu.reciprocal %118 {approx = true} : vector<32x1xf32> -> vector<32x1xf32>
    %122 = vector.broadcast %121 : vector<32x1xf32> to vector<32x8xf32>
    %123 = arith.mulf %120, %122 : vector<32x8xf32>
    %124 = tpu.concatenate %63, %83, %103, %123 in 1 : vector<32x8xf32>, vector<32x8xf32>, vector<32x8xf32>, vector<32x8xf32> -> vector<32x32xf32>
    %125 = arith.truncf %124 : vector<32x32xf32> to vector<32x32xbf16>
    %c0_35 = arith.constant 0 : index
    %c0_36 = arith.constant 0 : index
    %c0_37 = arith.constant 0 : index
    %126 = vector.load %arg6[%c0_35, %c0_36, %c0_37] : memref<2x32x32xbf16, #tpu.memory_space<vmem>>, vector<1x32x32xbf16>
    %127 = vector.shape_cast %126 : vector<1x32x32xbf16> to vector<32x32xbf16>
    %cst_38 = arith.constant dense<0.000000e+00> : vector<32x32xf32>
    %128 = tpu.matmul %125, %127, %cst_38 {dimension_numbers = #tpu.dot_dimension_numbers<[1], [0], [0], [1], [0, 0, 1, 1], [], []>} : vector<32x32xbf16>, vector<32x32xbf16>, vector<32x32xf32> -> vector<32x32xf32>
    %129 = arith.addf %4, %128 : vector<32x32xf32>
    %130 = vector.broadcast %11 : vector<1x32xf32> to vector<32x32xf32>
    %131 = arith.addf %129, %130 : vector<32x32xf32>
    %cst_39 = arith.constant dense<0.000000e+00> : vector<32xf32>
    %132 = vector.multi_reduction <add>, %131, %cst_39 [1] : vector<32x32xf32> to vector<32xf32>
    %133 = vector.shape_cast %132 : vector<32xf32> to vector<32x1xf32>
    %134 = arith.mulf %131, %131 : vector<32x32xf32>
    %cst_40 = arith.constant dense<0.000000e+00> : vector<32xf32>
    %135 = vector.multi_reduction <add>, %134, %cst_40 [1] : vector<32x32xf32> to vector<32xf32>
    %136 = vector.shape_cast %135 : vector<32xf32> to vector<32x1xf32>
    %cst_41 = arith.constant 3.125000e-02 : f32
    %137 = vector.broadcast %cst_41 : f32 to vector<32x1xf32>
    %138 = arith.mulf %133, %137 : vector<32x1xf32>
    %cst_42 = arith.constant 3.125000e-02 : f32
    %139 = vector.broadcast %cst_42 : f32 to vector<32x1xf32>
    %140 = arith.mulf %136, %139 : vector<32x1xf32>
    %141 = arith.mulf %138, %138 : vector<32x1xf32>
    %142 = arith.subf %140, %141 : vector<32x1xf32>
    %143 = vector.broadcast %138 : vector<32x1xf32> to vector<32x32xf32>
    %144 = arith.subf %131, %143 : vector<32x32xf32>
    %cst_43 = arith.constant 9.99999997E-7 : f32
    %145 = vector.broadcast %cst_43 : f32 to vector<32x1xf32>
    %146 = arith.addf %142, %145 : vector<32x1xf32>
    %147 = math.rsqrt %146 : vector<32x1xf32>
    %148 = vector.broadcast %147 : vector<32x1xf32> to vector<32x32xf32>
    %149 = arith.mulf %144, %148 : vector<32x32xf32>
    %150 = vector.broadcast %12 : vector<1x32xf32> to vector<32x32xf32>
    %151 = arith.mulf %149, %150 : vector<32x32xf32>
    %152 = vector.broadcast %13 : vector<1x32xf32> to vector<32x32xf32>
    %153 = arith.addf %151, %152 : vector<32x32xf32>
    %154 = arith.truncf %153 : vector<32x32xf32> to vector<32x32xbf16>
    %c0_44 = arith.constant 0 : index
    %c0_45 = arith.constant 0 : index
    %c0_46 = arith.constant 0 : index
    %155 = vector.load %arg7[%c0_44, %c0_45, %c0_46] : memref<2x32x128xbf16, #tpu.memory_space<vmem>>, vector<1x32x128xbf16>
    %156 = vector.shape_cast %155 : vector<1x32x128xbf16> to vector<32x128xbf16>
    %cst_47 = arith.constant dense<0.000000e+00> : vector<32x128xf32>
    %157 = tpu.matmul %154, %156, %cst_47 {dimension_numbers = #tpu.dot_dimension_numbers<[1], [0], [0], [1], [0, 0, 1, 1], [], []>} : vector<32x32xbf16>, vector<32x128xbf16>, vector<32x128xf32> -> vector<32x128xf32>
    %158 = vector.broadcast %14 : vector<1x128xf32> to vector<32x128xf32>
    %159 = arith.addf %157, %158 : vector<32x128xf32>
    %160 = arith.mulf %159, %159 : vector<32x128xf32>
    %161 = arith.mulf %159, %160 : vector<32x128xf32>
    %cst_48 = arith.constant 4.471500e-02 : f32
    %162 = vector.broadcast %cst_48 : f32 to vector<32x128xf32>
    %163 = arith.mulf %162, %161 : vector<32x128xf32>
    %164 = arith.addf %159, %163 : vector<32x128xf32>
    %cst_49 = arith.constant 0.797884583 : f32
    %165 = vector.broadcast %cst_49 : f32 to vector<32x128xf32>
    %166 = arith.mulf %165, %164 : vector<32x128xf32>
    %167 = math.tanh %166 : vector<32x128xf32>
    %cst_50 = arith.constant 1.000000e+00 : f32
    %168 = vector.broadcast %cst_50 : f32 to vector<32x128xf32>
    %169 = arith.addf %168, %167 : vector<32x128xf32>
    %cst_51 = arith.constant 5.000000e-01 : f32
    %170 = vector.broadcast %cst_51 : f32 to vector<32x128xf32>
    %171 = arith.mulf %170, %169 : vector<32x128xf32>
    %172 = arith.mulf %159, %171 : vector<32x128xf32>
    %173 = arith.truncf %172 : vector<32x128xf32> to vector<32x128xbf16>
    %c0_52 = arith.constant 0 : index
    %c0_53 = arith.constant 0 : index
    %c0_54 = arith.constant 0 : index
    %174 = vector.load %arg8[%c0_52, %c0_53, %c0_54] : memref<2x128x32xbf16, #tpu.memory_space<vmem>>, vector<1x128x32xbf16>
    %175 = vector.shape_cast %174 : vector<1x128x32xbf16> to vector<128x32xbf16>
    %cst_55 = arith.constant dense<0.000000e+00> : vector<32x32xf32>
    %176 = tpu.matmul %173, %175, %cst_55 {dimension_numbers = #tpu.dot_dimension_numbers<[1], [0], [0], [1], [0, 0, 1, 1], [], []>} : vector<32x128xbf16>, vector<128x32xbf16>, vector<32x32xf32> -> vector<32x32xf32>
    %177 = vector.broadcast %15 : vector<1x32xf32> to vector<32x32xf32>
    %178 = arith.addf %176, %177 : vector<32x32xf32>
    %179 = arith.addf %131, %178 : vector<32x32xf32>
    %c1 = arith.constant 1 : index
    %c0_56 = arith.constant 0 : index
    %c0_57 = arith.constant 0 : index
    %180 = vector.load %arg4[%c1, %c0_56, %c0_57] : memref<2x16x128xf32, #tpu.memory_space<vmem>>, vector<1x16x128xf32>
    %181 = vector.shape_cast %180 : vector<1x16x128xf32> to vector<16x128xf32>
    %182 = vector.extract_strided_slice %181 {offsets = [0, 0], sizes = [1, 32], strides = [1, 1]} : vector<16x128xf32> to vector<1x32xf32>
    %183 = vector.extract_strided_slice %181 {offsets = [1, 0], sizes = [1, 32], strides = [1, 1]} : vector<16x128xf32> to vector<1x32xf32>
    %184 = vector.extract_strided_slice %181 {offsets = [2, 0], sizes = [1, 96], strides = [1, 1]} : vector<16x128xf32> to vector<1x96xf32>
    %185 = vector.extract_strided_slice %181 {offsets = [3, 0], sizes = [1, 32], strides = [1, 1]} : vector<16x128xf32> to vector<1x32xf32>
    %186 = vector.extract_strided_slice %181 {offsets = [4, 0], sizes = [1, 32], strides = [1, 1]} : vector<16x128xf32> to vector<1x32xf32>
    %187 = vector.extract_strided_slice %181 {offsets = [5, 0], sizes = [1, 32], strides = [1, 1]} : vector<16x128xf32> to vector<1x32xf32>
    %188 = vector.extract_strided_slice %181 {offsets = [6, 0], sizes = [1, 128], strides = [1, 1]} : vector<16x128xf32> to vector<1x128xf32>
    %189 = vector.extract_strided_slice %181 {offsets = [7, 0], sizes = [1, 32], strides = [1, 1]} : vector<16x128xf32> to vector<1x32xf32>
    %cst_58 = arith.constant dense<0.000000e+00> : vector<32xf32>
    %190 = vector.multi_reduction <add>, %179, %cst_58 [1] : vector<32x32xf32> to vector<32xf32>
    %191 = vector.shape_cast %190 : vector<32xf32> to vector<32x1xf32>
    %192 = arith.mulf %179, %179 : vector<32x32xf32>
    %cst_59 = arith.constant dense<0.000000e+00> : vector<32xf32>
    %193 = vector.multi_reduction <add>, %192, %cst_59 [1] : vector<32x32xf32> to vector<32xf32>
    %194 = vector.shape_cast %193 : vector<32xf32> to vector<32x1xf32>
    %cst_60 = arith.constant 3.125000e-02 : f32
    %195 = vector.broadcast %cst_60 : f32 to vector<32x1xf32>
    %196 = arith.mulf %191, %195 : vector<32x1xf32>
    %cst_61 = arith.constant 3.125000e-02 : f32
    %197 = vector.broadcast %cst_61 : f32 to vector<32x1xf32>
    %198 = arith.mulf %194, %197 : vector<32x1xf32>
    %199 = arith.mulf %196, %196 : vector<32x1xf32>
    %200 = arith.subf %198, %199 : vector<32x1xf32>
    %201 = vector.broadcast %196 : vector<32x1xf32> to vector<32x32xf32>
    %202 = arith.subf %179, %201 : vector<32x32xf32>
    %cst_62 = arith.constant 9.99999997E-7 : f32
    %203 = vector.broadcast %cst_62 : f32 to vector<32x1xf32>
    %204 = arith.addf %200, %203 : vector<32x1xf32>
    %205 = math.rsqrt %204 : vector<32x1xf32>
    %206 = vector.broadcast %205 : vector<32x1xf32> to vector<32x32xf32>
    %207 = arith.mulf %202, %206 : vector<32x32xf32>
    %208 = vector.broadcast %182 : vector<1x32xf32> to vector<32x32xf32>
    %209 = arith.mulf %207, %208 : vector<32x32xf32>
    %210 = vector.broadcast %183 : vector<1x32xf32> to vector<32x32xf32>
    %211 = arith.addf %209, %210 : vector<32x32xf32>
    %212 = arith.truncf %211 : vector<32x32xf32> to vector<32x32xbf16>
    %c1_63 = arith.constant 1 : index
    %c0_64 = arith.constant 0 : index
    %c0_65 = arith.constant 0 : index
    %213 = vector.load %arg5[%c1_63, %c0_64, %c0_65] : memref<2x32x96xbf16, #tpu.memory_space<vmem>>, vector<1x32x96xbf16>
    %214 = vector.shape_cast %213 : vector<1x32x96xbf16> to vector<32x96xbf16>
    %cst_66 = arith.constant dense<0.000000e+00> : vector<32x96xf32>
    %215 = tpu.matmul %212, %214, %cst_66 {dimension_numbers = #tpu.dot_dimension_numbers<[1], [0], [0], [1], [0, 0, 1, 1], [], []>} : vector<32x32xbf16>, vector<32x96xbf16>, vector<32x96xf32> -> vector<32x96xf32>
    %216 = vector.broadcast %184 : vector<1x96xf32> to vector<32x96xf32>
    %217 = arith.addf %215, %216 : vector<32x96xf32>
    %218 = vector.extract_strided_slice %217 {offsets = [0, 0], sizes = [32, 8], strides = [1, 1]} : vector<32x96xf32> to vector<32x8xf32>
    %219 = arith.truncf %218 : vector<32x8xf32> to vector<32x8xbf16>
    %220 = vector.extract_strided_slice %217 {offsets = [0, 32], sizes = [32, 8], strides = [1, 1]} : vector<32x96xf32> to vector<32x8xf32>
    %221 = arith.truncf %220 : vector<32x8xf32> to vector<32x8xbf16>
    %222 = vector.extract_strided_slice %217 {offsets = [0, 64], sizes = [32, 8], strides = [1, 1]} : vector<32x96xf32> to vector<32x8xf32>
    %223 = arith.truncf %222 : vector<32x8xf32> to vector<32x8xbf16>
    "tpu.trace_start"() <{level = 10 : i32, message = "nd,md->nm"}> : () -> ()
    %cst_67 = arith.constant dense<0.000000e+00> : vector<32x32xf32>
    %224 = tpu.matmul %219, %221, %cst_67 {dimension_numbers = #tpu.dot_dimension_numbers<[1], [1], [0], [0], [0, 0, 1, 0], [], []>} : vector<32x8xbf16>, vector<32x8xbf16>, vector<32x32xf32> -> vector<32x32xf32>
    "tpu.trace_stop"() : () -> ()
    %225 = arith.addf %224, %5 : vector<32x32xf32>
    %cst_68 = arith.constant dense<0xFF800000> : vector<32xf32>
    %226 = vector.multi_reduction <maximumf>, %225, %cst_68 [1] : vector<32x32xf32> to vector<32xf32>
    %227 = vector.shape_cast %226 : vector<32xf32> to vector<32x1xf32>
    %228 = vector.broadcast %227 : vector<32x1xf32> to vector<32x32xf32>
    %229 = arith.subf %225, %228 : vector<32x32xf32>
    %230 = math.exp %229 : vector<32x32xf32>
    %cst_69 = arith.constant dense<0.000000e+00> : vector<32xf32>
    %231 = vector.multi_reduction <add>, %230, %cst_69 [1] : vector<32x32xf32> to vector<32xf32>
    %232 = vector.shape_cast %231 : vector<32xf32> to vector<32x1xf32>
    %233 = arith.truncf %230 : vector<32x32xf32> to vector<32x32xbf16>
    %cst_70 = arith.constant dense<0.000000e+00> : vector<32x8xf32>
    %234 = tpu.matmul %233, %223, %cst_70 {dimension_numbers = #tpu.dot_dimension_numbers<[1], [0], [0], [1], [0, 0, 1, 1], [], []>} : vector<32x32xbf16>, vector<32x8xbf16>, vector<32x8xf32> -> vector<32x8xf32>
    %235 = tpu.reciprocal %232 {approx = true} : vector<32x1xf32> -> vector<32x1xf32>
    %236 = vector.broadcast %235 : vector<32x1xf32> to vector<32x8xf32>
    %237 = arith.mulf %234, %236 : vector<32x8xf32>
    %238 = vector.extract_strided_slice %217 {offsets = [0, 8], sizes = [32, 8], strides = [1, 1]} : vector<32x96xf32> to vector<32x8xf32>
    %239 = arith.truncf %238 : vector<32x8xf32> to vector<32x8xbf16>
    %240 = vector.extract_strided_slice %217 {offsets = [0, 40], sizes = [32, 8], strides = [1, 1]} : vector<32x96xf32> to vector<32x8xf32>
    %241 = arith.truncf %240 : vector<32x8xf32> to vector<32x8xbf16>
    %242 = vector.extract_strided_slice %217 {offsets = [0, 72], sizes = [32, 8], strides = [1, 1]} : vector<32x96xf32> to vector<32x8xf32>
    %243 = arith.truncf %242 : vector<32x8xf32> to vector<32x8xbf16>
    "tpu.trace_start"() <{level = 10 : i32, message = "nd,md->nm"}> : () -> ()
    %cst_71 = arith.constant dense<0.000000e+00> : vector<32x32xf32>
    %244 = tpu.matmul %239, %241, %cst_71 {dimension_numbers = #tpu.dot_dimension_numbers<[1], [1], [0], [0], [0, 0, 1, 0], [], []>} : vector<32x8xbf16>, vector<32x8xbf16>, vector<32x32xf32> -> vector<32x32xf32>
    "tpu.trace_stop"() : () -> ()
    %245 = arith.addf %244, %5 : vector<32x32xf32>
    %cst_72 = arith.constant dense<0xFF800000> : vector<32xf32>
    %246 = vector.multi_reduction <maximumf>, %245, %cst_72 [1] : vector<32x32xf32> to vector<32xf32>
    %247 = vector.shape_cast %246 : vector<32xf32> to vector<32x1xf32>
    %248 = vector.broadcast %247 : vector<32x1xf32> to vector<32x32xf32>
    %249 = arith.subf %245, %248 : vector<32x32xf32>
    %250 = math.exp %249 : vector<32x32xf32>
    %cst_73 = arith.constant dense<0.000000e+00> : vector<32xf32>
    %251 = vector.multi_reduction <add>, %250, %cst_73 [1] : vector<32x32xf32> to vector<32xf32>
    %252 = vector.shape_cast %251 : vector<32xf32> to vector<32x1xf32>
    %253 = arith.truncf %250 : vector<32x32xf32> to vector<32x32xbf16>
    %cst_74 = arith.constant dense<0.000000e+00> : vector<32x8xf32>
    %254 = tpu.matmul %253, %243, %cst_74 {dimension_numbers = #tpu.dot_dimension_numbers<[1], [0], [0], [1], [0, 0, 1, 1], [], []>} : vector<32x32xbf16>, vector<32x8xbf16>, vector<32x8xf32> -> vector<32x8xf32>
    %255 = tpu.reciprocal %252 {approx = true} : vector<32x1xf32> -> vector<32x1xf32>
    %256 = vector.broadcast %255 : vector<32x1xf32> to vector<32x8xf32>
    %257 = arith.mulf %254, %256 : vector<32x8xf32>
    %258 = vector.extract_strided_slice %217 {offsets = [0, 16], sizes = [32, 8], strides = [1, 1]} : vector<32x96xf32> to vector<32x8xf32>
    %259 = arith.truncf %258 : vector<32x8xf32> to vector<32x8xbf16>
    %260 = vector.extract_strided_slice %217 {offsets = [0, 48], sizes = [32, 8], strides = [1, 1]} : vector<32x96xf32> to vector<32x8xf32>
    %261 = arith.truncf %260 : vector<32x8xf32> to vector<32x8xbf16>
    %262 = vector.extract_strided_slice %217 {offsets = [0, 80], sizes = [32, 8], strides = [1, 1]} : vector<32x96xf32> to vector<32x8xf32>
    %263 = arith.truncf %262 : vector<32x8xf32> to vector<32x8xbf16>
    "tpu.trace_start"() <{level = 10 : i32, message = "nd,md->nm"}> : () -> ()
    %cst_75 = arith.constant dense<0.000000e+00> : vector<32x32xf32>
    %264 = tpu.matmul %259, %261, %cst_75 {dimension_numbers = #tpu.dot_dimension_numbers<[1], [1], [0], [0], [0, 0, 1, 0], [], []>} : vector<32x8xbf16>, vector<32x8xbf16>, vector<32x32xf32> -> vector<32x32xf32>
    "tpu.trace_stop"() : () -> ()
    %265 = arith.addf %264, %5 : vector<32x32xf32>
    %cst_76 = arith.constant dense<0xFF800000> : vector<32xf32>
    %266 = vector.multi_reduction <maximumf>, %265, %cst_76 [1] : vector<32x32xf32> to vector<32xf32>
    %267 = vector.shape_cast %266 : vector<32xf32> to vector<32x1xf32>
    %268 = vector.broadcast %267 : vector<32x1xf32> to vector<32x32xf32>
    %269 = arith.subf %265, %268 : vector<32x32xf32>
    %270 = math.exp %269 : vector<32x32xf32>
    %cst_77 = arith.constant dense<0.000000e+00> : vector<32xf32>
    %271 = vector.multi_reduction <add>, %270, %cst_77 [1] : vector<32x32xf32> to vector<32xf32>
    %272 = vector.shape_cast %271 : vector<32xf32> to vector<32x1xf32>
    %273 = arith.truncf %270 : vector<32x32xf32> to vector<32x32xbf16>
    %cst_78 = arith.constant dense<0.000000e+00> : vector<32x8xf32>
    %274 = tpu.matmul %273, %263, %cst_78 {dimension_numbers = #tpu.dot_dimension_numbers<[1], [0], [0], [1], [0, 0, 1, 1], [], []>} : vector<32x32xbf16>, vector<32x8xbf16>, vector<32x8xf32> -> vector<32x8xf32>
    %275 = tpu.reciprocal %272 {approx = true} : vector<32x1xf32> -> vector<32x1xf32>
    %276 = vector.broadcast %275 : vector<32x1xf32> to vector<32x8xf32>
    %277 = arith.mulf %274, %276 : vector<32x8xf32>
    %278 = vector.extract_strided_slice %217 {offsets = [0, 24], sizes = [32, 8], strides = [1, 1]} : vector<32x96xf32> to vector<32x8xf32>
    %279 = arith.truncf %278 : vector<32x8xf32> to vector<32x8xbf16>
    %280 = vector.extract_strided_slice %217 {offsets = [0, 56], sizes = [32, 8], strides = [1, 1]} : vector<32x96xf32> to vector<32x8xf32>
    %281 = arith.truncf %280 : vector<32x8xf32> to vector<32x8xbf16>
    %282 = vector.extract_strided_slice %217 {offsets = [0, 88], sizes = [32, 8], strides = [1, 1]} : vector<32x96xf32> to vector<32x8xf32>
    %283 = arith.truncf %282 : vector<32x8xf32> to vector<32x8xbf16>
    "tpu.trace_start"() <{level = 10 : i32, message = "nd,md->nm"}> : () -> ()
    %cst_79 = arith.constant dense<0.000000e+00> : vector<32x32xf32>
    %284 = tpu.matmul %279, %281, %cst_79 {dimension_numbers = #tpu.dot_dimension_numbers<[1], [1], [0], [0], [0, 0, 1, 0], [], []>} : vector<32x8xbf16>, vector<32x8xbf16>, vector<32x32xf32> -> vector<32x32xf32>
    "tpu.trace_stop"() : () -> ()
    %285 = arith.addf %284, %5 : vector<32x32xf32>
    %cst_80 = arith.constant dense<0xFF800000> : vector<32xf32>
    %286 = vector.multi_reduction <maximumf>, %285, %cst_80 [1] : vector<32x32xf32> to vector<32xf32>
    %287 = vector.shape_cast %286 : vector<32xf32> to vector<32x1xf32>
    %288 = vector.broadcast %287 : vector<32x1xf32> to vector<32x32xf32>
    %289 = arith.subf %285, %288 : vector<32x32xf32>
    %290 = math.exp %289 : vector<32x32xf32>
    %cst_81 = arith.constant dense<0.000000e+00> : vector<32xf32>
    %291 = vector.multi_reduction <add>, %290, %cst_81 [1] : vector<32x32xf32> to vector<32xf32>
    %292 = vector.shape_cast %291 : vector<32xf32> to vector<32x1xf32>
    %293 = arith.truncf %290 : vector<32x32xf32> to vector<32x32xbf16>
    %cst_82 = arith.constant dense<0.000000e+00> : vector<32x8xf32>
    %294 = tpu.matmul %293, %283, %cst_82 {dimension_numbers = #tpu.dot_dimension_numbers<[1], [0], [0], [1], [0, 0, 1, 1], [], []>} : vector<32x32xbf16>, vector<32x8xbf16>, vector<32x8xf32> -> vector<32x8xf32>
    %295 = tpu.reciprocal %292 {approx = true} : vector<32x1xf32> -> vector<32x1xf32>
    %296 = vector.broadcast %295 : vector<32x1xf32> to vector<32x8xf32>
    %297 = arith.mulf %294, %296 : vector<32x8xf32>
    %298 = tpu.concatenate %237, %257, %277, %297 in 1 : vector<32x8xf32>, vector<32x8xf32>, vector<32x8xf32>, vector<32x8xf32> -> vector<32x32xf32>
    %299 = arith.truncf %298 : vector<32x32xf32> to vector<32x32xbf16>
    %c1_83 = arith.constant 1 : index
    %c0_84 = arith.constant 0 : index
    %c0_85 = arith.constant 0 : index
    %300 = vector.load %arg6[%c1_83, %c0_84, %c0_85] : memref<2x32x32xbf16, #tpu.memory_space<vmem>>, vector<1x32x32xbf16>
    %301 = vector.shape_cast %300 : vector<1x32x32xbf16> to vector<32x32xbf16>
    %cst_86 = arith.constant dense<0.000000e+00> : vector<32x32xf32>
    %302 = tpu.matmul %299, %301, %cst_86 {dimension_numbers = #tpu.dot_dimension_numbers<[1], [0], [0], [1], [0, 0, 1, 1], [], []>} : vector<32x32xbf16>, vector<32x32xbf16>, vector<32x32xf32> -> vector<32x32xf32>
    %303 = arith.addf %179, %302 : vector<32x32xf32>
    %304 = vector.broadcast %185 : vector<1x32xf32> to vector<32x32xf32>
    %305 = arith.addf %303, %304 : vector<32x32xf32>
    %cst_87 = arith.constant dense<0.000000e+00> : vector<32xf32>
    %306 = vector.multi_reduction <add>, %305, %cst_87 [1] : vector<32x32xf32> to vector<32xf32>
    %307 = vector.shape_cast %306 : vector<32xf32> to vector<32x1xf32>
    %308 = arith.mulf %305, %305 : vector<32x32xf32>
    %cst_88 = arith.constant dense<0.000000e+00> : vector<32xf32>
    %309 = vector.multi_reduction <add>, %308, %cst_88 [1] : vector<32x32xf32> to vector<32xf32>
    %310 = vector.shape_cast %309 : vector<32xf32> to vector<32x1xf32>
    %cst_89 = arith.constant 3.125000e-02 : f32
    %311 = vector.broadcast %cst_89 : f32 to vector<32x1xf32>
    %312 = arith.mulf %307, %311 : vector<32x1xf32>
    %cst_90 = arith.constant 3.125000e-02 : f32
    %313 = vector.broadcast %cst_90 : f32 to vector<32x1xf32>
    %314 = arith.mulf %310, %313 : vector<32x1xf32>
    %315 = arith.mulf %312, %312 : vector<32x1xf32>
    %316 = arith.subf %314, %315 : vector<32x1xf32>
    %317 = vector.broadcast %312 : vector<32x1xf32> to vector<32x32xf32>
    %318 = arith.subf %305, %317 : vector<32x32xf32>
    %cst_91 = arith.constant 9.99999997E-7 : f32
    %319 = vector.broadcast %cst_91 : f32 to vector<32x1xf32>
    %320 = arith.addf %316, %319 : vector<32x1xf32>
    %321 = math.rsqrt %320 : vector<32x1xf32>
    %322 = vector.broadcast %321 : vector<32x1xf32> to vector<32x32xf32>
    %323 = arith.mulf %318, %322 : vector<32x32xf32>
    %324 = vector.broadcast %186 : vector<1x32xf32> to vector<32x32xf32>
    %325 = arith.mulf %323, %324 : vector<32x32xf32>
    %326 = vector.broadcast %187 : vector<1x32xf32> to vector<32x32xf32>
    %327 = arith.addf %325, %326 : vector<32x32xf32>
    %328 = arith.truncf %327 : vector<32x32xf32> to vector<32x32xbf16>
    %c1_92 = arith.constant 1 : index
    %c0_93 = arith.constant 0 : index
    %c0_94 = arith.constant 0 : index
    %329 = vector.load %arg7[%c1_92, %c0_93, %c0_94] : memref<2x32x128xbf16, #tpu.memory_space<vmem>>, vector<1x32x128xbf16>
    %330 = vector.shape_cast %329 : vector<1x32x128xbf16> to vector<32x128xbf16>
    %cst_95 = arith.constant dense<0.000000e+00> : vector<32x128xf32>
    %331 = tpu.matmul %328, %330, %cst_95 {dimension_numbers = #tpu.dot_dimension_numbers<[1], [0], [0], [1], [0, 0, 1, 1], [], []>} : vector<32x32xbf16>, vector<32x128xbf16>, vector<32x128xf32> -> vector<32x128xf32>
    %332 = vector.broadcast %188 : vector<1x128xf32> to vector<32x128xf32>
    %333 = arith.addf %331, %332 : vector<32x128xf32>
    %334 = arith.mulf %333, %333 : vector<32x128xf32>
    %335 = arith.mulf %333, %334 : vector<32x128xf32>
    %cst_96 = arith.constant 4.471500e-02 : f32
    %336 = vector.broadcast %cst_96 : f32 to vector<32x128xf32>
    %337 = arith.mulf %336, %335 : vector<32x128xf32>
    %338 = arith.addf %333, %337 : vector<32x128xf32>
    %cst_97 = arith.constant 0.797884583 : f32
    %339 = vector.broadcast %cst_97 : f32 to vector<32x128xf32>
    %340 = arith.mulf %339, %338 : vector<32x128xf32>
    %341 = math.tanh %340 : vector<32x128xf32>
    %cst_98 = arith.constant 1.000000e+00 : f32
    %342 = vector.broadcast %cst_98 : f32 to vector<32x128xf32>
    %343 = arith.addf %342, %341 : vector<32x128xf32>
    %cst_99 = arith.constant 5.000000e-01 : f32
    %344 = vector.broadcast %cst_99 : f32 to vector<32x128xf32>
    %345 = arith.mulf %344, %343 : vector<32x128xf32>
    %346 = arith.mulf %333, %345 : vector<32x128xf32>
    %347 = arith.truncf %346 : vector<32x128xf32> to vector<32x128xbf16>
    %c1_100 = arith.constant 1 : index
    %c0_101 = arith.constant 0 : index
    %c0_102 = arith.constant 0 : index
    %348 = vector.load %arg8[%c1_100, %c0_101, %c0_102] : memref<2x128x32xbf16, #tpu.memory_space<vmem>>, vector<1x128x32xbf16>
    %349 = vector.shape_cast %348 : vector<1x128x32xbf16> to vector<128x32xbf16>
    %cst_103 = arith.constant dense<0.000000e+00> : vector<32x32xf32>
    %350 = tpu.matmul %347, %349, %cst_103 {dimension_numbers = #tpu.dot_dimension_numbers<[1], [0], [0], [1], [0, 0, 1, 1], [], []>} : vector<32x128xbf16>, vector<128x32xbf16>, vector<32x32xf32> -> vector<32x32xf32>
    %351 = vector.broadcast %189 : vector<1x32xf32> to vector<32x32xf32>
    %352 = arith.addf %350, %351 : vector<32x32xf32>
    %353 = arith.addf %305, %352 : vector<32x32xf32>
    %c0_104 = arith.constant 0 : index
    %c0_105 = arith.constant 0 : index
    %c0_106 = arith.constant 0 : index
    %354 = vector.load %arg4[%c0_104, %c0_105, %c0_106] : memref<2x16x128xf32, #tpu.memory_space<vmem>>, vector<1x16x128xf32>
    %355 = vector.shape_cast %354 : vector<1x16x128xf32> to vector<16x128xf32>
    %356 = vector.extract_strided_slice %355 {offsets = [8, 0], sizes = [1, 32], strides = [1, 1]} : vector<16x128xf32> to vector<1x32xf32>
    %357 = vector.extract_strided_slice %355 {offsets = [9, 0], sizes = [1, 32], strides = [1, 1]} : vector<16x128xf32> to vector<1x32xf32>
    %cst_107 = arith.constant dense<0.000000e+00> : vector<32xf32>
    %358 = vector.multi_reduction <add>, %353, %cst_107 [1] : vector<32x32xf32> to vector<32xf32>
    %359 = vector.shape_cast %358 : vector<32xf32> to vector<32x1xf32>
    %360 = arith.mulf %353, %353 : vector<32x32xf32>
    %cst_108 = arith.constant dense<0.000000e+00> : vector<32xf32>
    %361 = vector.multi_reduction <add>, %360, %cst_108 [1] : vector<32x32xf32> to vector<32xf32>
    %362 = vector.shape_cast %361 : vector<32xf32> to vector<32x1xf32>
    %cst_109 = arith.constant 3.125000e-02 : f32
    %363 = vector.broadcast %cst_109 : f32 to vector<32x1xf32>
    %364 = arith.mulf %359, %363 : vector<32x1xf32>
    %cst_110 = arith.constant 3.125000e-02 : f32
    %365 = vector.broadcast %cst_110 : f32 to vector<32x1xf32>
    %366 = arith.mulf %362, %365 : vector<32x1xf32>
    %367 = arith.mulf %364, %364 : vector<32x1xf32>
    %368 = arith.subf %366, %367 : vector<32x1xf32>
    %369 = vector.broadcast %364 : vector<32x1xf32> to vector<32x32xf32>
    %370 = arith.subf %353, %369 : vector<32x32xf32>
    %cst_111 = arith.constant 9.99999997E-7 : f32
    %371 = vector.broadcast %cst_111 : f32 to vector<32x1xf32>
    %372 = arith.addf %368, %371 : vector<32x1xf32>
    %373 = math.rsqrt %372 : vector<32x1xf32>
    %374 = vector.broadcast %373 : vector<32x1xf32> to vector<32x32xf32>
    %375 = arith.mulf %370, %374 : vector<32x32xf32>
    %376 = vector.broadcast %356 : vector<1x32xf32> to vector<32x32xf32>
    %377 = arith.mulf %375, %376 : vector<32x32xf32>
    %378 = vector.broadcast %357 : vector<1x32xf32> to vector<32x32xf32>
    %379 = arith.addf %377, %378 : vector<32x32xf32>
    %cst_112 = arith.constant 0.000000e+00 : f32
    %380 = vector.broadcast %cst_112 : f32 to vector<8x128xf32>
    %c0_113 = arith.constant 0 : index
    %c0_114 = arith.constant 0 : index
    %381 = vector.load %arg9[%c0_113, %c0_114] : memref<8x128xf32, #tpu.memory_space<vmem>>, vector<8x128xf32>
    tpu.vector_store %arg9[%c0_113, %c0_114], %380 {strides = array<i32>} : memref<8x128xf32, #tpu.memory_space<vmem>>, vector<8x128xf32>,
    %382 = vector.extract_strided_slice %379 {offsets = [0, 0], sizes = [8, 32], strides = [1, 1]} : vector<32x32xf32> to vector<8x32xf32>
    %cst_115 = arith.constant dense<0.000000e+00> : vector<32xf32>
    %383 = vector.multi_reduction <add>, %382, %cst_115 [0] : vector<8x32xf32> to vector<32xf32>
    %384 = vector.shape_cast %383 : vector<32xf32> to vector<1x32xf32>
    %cst_116 = arith.constant 1.250000e-01 : f32
    %385 = vector.broadcast %cst_116 : f32 to vector<1x32xf32>
    %386 = arith.mulf %384, %385 : vector<1x32xf32>
    %cst_117 = arith.constant 0.000000e+00 : f32
    %387 = vector.broadcast %cst_117 : f32 to vector<1x96xf32>
    %388 = tpu.concatenate %386, %387 in 1 : vector<1x32xf32>, vector<1x96xf32> -> vector<1x128xf32>
    %c0_118 = arith.constant 0 : index
    %c0_119 = arith.constant 0 : index
    %389 = vector.load %arg9[%c0_118, %c0_119] : memref<8x128xf32, #tpu.memory_space<vmem>>, vector<1x128xf32>
    tpu.vector_store %arg9[%c0_118, %c0_119], %388 {strides = array<i32>} : memref<8x128xf32, #tpu.memory_space<vmem>>, vector<1x128xf32>,
    %390 = vector.extract_strided_slice %379 {offsets = [16, 0], sizes = [8, 32], strides = [1, 1]} : vector<32x32xf32> to vector<8x32xf32>
    %cst_120 = arith.constant dense<0.000000e+00> : vector<32xf32>
    %391 = vector.multi_reduction <add>, %390, %cst_120 [0] : vector<8x32xf32> to vector<32xf32>
    %392 = vector.shape_cast %391 : vector<32xf32> to vector<1x32xf32>
    %cst_121 = arith.constant 1.250000e-01 : f32
    %393 = vector.broadcast %cst_121 : f32 to vector<1x32xf32>
    %394 = arith.mulf %392, %393 : vector<1x32xf32>
    %cst_122 = arith.constant 0.000000e+00 : f32
    %395 = vector.broadcast %cst_122 : f32 to vector<1x96xf32>
    %396 = tpu.concatenate %394, %395 in 1 : vector<1x32xf32>, vector<1x96xf32> -> vector<1x128xf32>
    %c1_123 = arith.constant 1 : index
    %c0_124 = arith.constant 0 : index
    %397 = vector.load %arg9[%c1_123, %c0_124] : memref<8x128xf32, #tpu.memory_space<vmem>>, vector<1x128xf32>
    tpu.vector_store %arg9[%c1_123, %c0_124], %396 {strides = array<i32>} : memref<8x128xf32, #tpu.memory_space<vmem>>, vector<1x128xf32>,
    return
  }
}

</mosaic_0001>

<llo_original>
// kernel: prithvi_vit_forward.1
$region0: #{prithvi_vit_forward.1}
  #allocation0 [shape = 'u32[]', space=smem, size = 0x4, offset = 0x4, fixed_abs, tag = 'smem constant byte address 0x4 - core index']
  #allocation1 [shape = 'u32[72,128]{1,0:T(1,128)}', space=vmem, size = 0x9000, scoped, tag = 'internal scratch']
  %s0 = inlined_call_operand.vmem [shape: bf16[32,256], index: 0, kind: input, shape index: {}]
  %s1 = inlined_call_operand.vmem [shape: bf16[256,32], index: 1, kind: input, shape index: {}]
  %s2 = inlined_call_operand.vmem [shape: f32[32,32], index: 2, kind: input, shape index: {}]
  %s3 = inlined_call_operand.vmem [shape: f32[32,32], index: 3, kind: input, shape index: {}]
  %s4 = inlined_call_operand.vmem [shape: f32[2,16,128], index: 4, kind: input, shape index: {}]
  %s5 = inlined_call_operand.vmem [shape: bf16[2,32,96], index: 5, kind: input, shape index: {}]
  %s6 = inlined_call_operand.vmem [shape: bf16[2,32,32], index: 6, kind: input, shape index: {}]
  %s7 = inlined_call_operand.vmem [shape: bf16[2,32,128], index: 7, kind: input, shape index: {}]
  %s8 = inlined_call_operand.vmem [shape: bf16[2,128,32], index: 8, kind: input, shape index: {}]
  %s9 = inlined_call_operand.vmem [shape: f32[8,128], index: 9, kind: output, shape index: {}]
  %s10 = sld [smem:[#allocation0]]
  $region46: #{prithvi_vit_forward.1} parent=0
    _
  %s12 = ssub.s32 1, %s10
  %s13 = scalar_select 0, %s12, %s10
  // Predicated region
  $region2: #{prithvi_vit_forward.1} parent=0 // pred_check
    _
  $region3: #{prithvi_vit_forward.1} parent=0 // pred_check_branch
    %15 = sbr.rel (0) target = $region5
  $region4: #{prithvi_vit_forward.1} parent=0 // pred_region
    _
  $region5: #{prithvi_vit_forward.1} parent=0 // pred_fallthru
    _
  // Predicated region
  $region6: #{prithvi_vit_forward.1} parent=0 // pred_check
    _
  $region7: #{prithvi_vit_forward.1} parent=0 // pred_check_branch
    %17 = sbr.rel (0) target = $region9
  $region8: #{prithvi_vit_forward.1} parent=0 // pred_region
    _
  $region9: #{prithvi_vit_forward.1} parent=0 // pred_fallthru
    _
  // Predicated region
  $region10: #{prithvi_vit_forward.1} parent=0 // pred_check
    _
  $region11: #{prithvi_vit_forward.1} parent=0 // pred_check_branch
    %19 = sbr.rel (0) target = $region13
  $region12: #{prithvi_vit_forward.1} parent=0 // pred_region
    _
  $region13: #{prithvi_vit_forward.1} parent=0 // pred_fallthru
    _
  // Predicated region
  $region14: #{prithvi_vit_forward.1} parent=0 // pred_check
    _
  $region15: #{prithvi_vit_forward.1} parent=0 // pred_check_branch
    %21 = sbr.rel (0) target = $region17
  $region16: #{prithvi_vit_forward.1} parent=0 // pred_region
    _
  $region17: #{prithvi_vit_forward.1} parent=0 // pred_fallthru
    _
  // Predicated region
  $region18: #{prithvi_vit_forward.1} parent=0 // pred_check
    _
  $region19: #{prithvi_vit_forward.1} parent=0 // pred_check_branch
    %23 = sbr.rel (0) target = $region21
  $region20: #{prithvi_vit_forward.1} parent=0 // pred_region
    _
  $region21: #{prithvi_vit_forward.1} parent=0 // pred_fallthru
    _
  // Predicated region
  $region22: #{prithvi_vit_forward.1} parent=0 // pred_check
    _
  $region23: #{prithvi_vit_forward.1} parent=0 // pred_check_branch
    %25 = sbr.rel (0) target = $region25
  $region24: #{prithvi_vit_forward.1} parent=0 // pred_region
    _
  $region25: #{prithvi_vit_forward.1} parent=0 // pred_fallthru
    _
  // Predicated region
  $region26: #{prithvi_vit_forward.1} parent=0 // pred_check
    _
  $region27: #{prithvi_vit_forward.1} parent=0 // pred_check_branch
    %27 = sbr.rel (0) target = $region29
  $region28: #{prithvi_vit_forward.1} parent=0 // pred_region
    _
  $region29: #{prithvi_vit_forward.1} parent=0 // pred_fallthru
    _
  // Predicated region
  $region30: #{prithvi_vit_forward.1} parent=0 // pred_check
    _
  $region31: #{prithvi_vit_forward.1} parent=0 // pred_check_branch
    %29 = sbr.rel (0) target = $region33
  $region32: #{prithvi_vit_forward.1} parent=0 // pred_region
    _
  $region33: #{prithvi_vit_forward.1} parent=0 // pred_fallthru
    _
  // Predicated region
  $region34: #{prithvi_vit_forward.1} parent=0 // pred_check
    _
  $region35: #{prithvi_vit_forward.1} parent=0 // pred_check_branch
    %31 = sbr.rel (0) target = $region37
  $region36: #{prithvi_vit_forward.1} parent=0 // pred_region
    _
  $region37: #{prithvi_vit_forward.1} parent=0 // pred_fallthru
    _
  %v33 = vld [vmem:[%s0] sm:$0xff]
  %v34 = vld [vmem:[%s0 + $0x8] sm:$0xff]
  %v35 = vld [vmem:[%s0 + $0x10] sm:$0xff]
  %v36 = vld [vmem:[%s0 + $0x18] sm:$0xff]
  %v37 = vld [vmem:[%s1] sm:$0xf]
  %v38 = vld [vmem:[%s1 + $0x4] sm:$0xf]
  %v39 = vld [vmem:[%s1 + $0x8] sm:$0xf]
  %v40 = vld [vmem:[%s1 + $0xc] sm:$0xf]
  %v41 = vld [vmem:[%s1 + $0x10] sm:$0xf]
  %v42 = vld [vmem:[%s1 + $0x14] sm:$0xf]
  %v43 = vld [vmem:[%s1 + $0x18] sm:$0xf]
  %v44 = vld [vmem:[%s1 + $0x1c] sm:$0xf]
  %v45 = vld [vmem:[%s1 + $0x20] sm:$0xf]
  %v46 = vld [vmem:[%s1 + $0x24] sm:$0xf]
  %v47 = vld [vmem:[%s1 + $0x28] sm:$0xf]
  %v48 = vld [vmem:[%s1 + $0x2c] sm:$0xf]
  %v49 = vld [vmem:[%s1 + $0x30] sm:$0xf]
  %v50 = vld [vmem:[%s1 + $0x34] sm:$0xf]
  %v51 = vld [vmem:[%s1 + $0x38] sm:$0xf]
  %v52 = vld [vmem:[%s1 + $0x3c] sm:$0xf]
  %v53 = vld [vmem:[%s1 + $0x40] sm:$0xf]
  %v54 = vld [vmem:[%s1 + $0x44] sm:$0xf]
  %v55 = vld [vmem:[%s1 + $0x48] sm:$0xf]
  %v56 = vld [vmem:[%s1 + $0x4c] sm:$0xf]
  %v57 = vld [vmem:[%s1 + $0x50] sm:$0xf]
  %v58 = vld [vmem:[%s1 + $0x54] sm:$0xf]
  %v59 = vld [vmem:[%s1 + $0x58] sm:$0xf]
  %v60 = vld [vmem:[%s1 + $0x5c] sm:$0xf]
  %v61 = vld [vmem:[%s1 + $0x60] sm:$0xf]
  %v62 = vld [vmem:[%s1 + $0x64] sm:$0xf]
  %v63 = vld [vmem:[%s1 + $0x68] sm:$0xf]
  %v64 = vld [vmem:[%s1 + $0x6c] sm:$0xf]
  %v65 = vld [vmem:[%s1 + $0x70] sm:$0xf]
  %v66 = vld [vmem:[%s1 + $0x74] sm:$0xf]
  %v67 = vld [vmem:[%s1 + $0x78] sm:$0xf]
  %v68 = vld [vmem:[%s1 + $0x7c] sm:$0xf]
  %v69 = vld [vmem:[%s2] sm:$0xff]
  %v70 = vld [vmem:[%s2 + $0x8] sm:$0xff]
  %v71 = vld [vmem:[%s2 + $0x10] sm:$0xff]
  %v72 = vld [vmem:[%s2 + $0x18] sm:$0xff]
  %v77 = vunpack.c.l.b16 %v33
  %v78 = vunpack.c.h.b16 %v33
  %v79 = vunpack.c.l.b16 %v34
  %v80 = vunpack.c.h.b16 %v34
  %v81 = vunpack.c.l.b16 %v35
  %v82 = vunpack.c.h.b16 %v35
  %v83 = vunpack.c.l.b16 %v36
  %v84 = vunpack.c.h.b16 %v36
  %v85 = vpack.c.b16 %v79, %v77
  %v86 = vpack.c.b16 %v80, %v78
  %v87 = vpack.c.b16 %v83, %v81
  %v88 = vpack.c.b16 %v84, %v82
  %v125 = vunpack.c.l.b16 %v37
  %v126 = vunpack.c.l.b16 %v38
  %v127 = vunpack.c.l.b16 %v39
  %v128 = vunpack.c.l.b16 %v40
  %v129 = vunpack.c.l.b16 %v41
  %v130 = vunpack.c.l.b16 %v42
  %v131 = vunpack.c.l.b16 %v43
  %v132 = vunpack.c.l.b16 %v44
  %v133 = vunpack.c.l.b16 %v45
  %v134 = vunpack.c.l.b16 %v46
  %v135 = vunpack.c.l.b16 %v47
  %v136 = vunpack.c.l.b16 %v48
  %v137 = vunpack.c.l.b16 %v49
  %v138 = vunpack.c.l.b16 %v50
  %v139 = vunpack.c.l.b16 %v51
  %v140 = vunpack.c.l.b16 %v52
  %v141 = vunpack.c.l.b16 %v53
  %v142 = vunpack.c.l.b16 %v54
  %v143 = vunpack.c.l.b16 %v55
  %v144 = vunpack.c.l.b16 %v56
  %v145 = vunpack.c.l.b16 %v57
  %v146 = vunpack.c.l.b16 %v58
  %v147 = vunpack.c.l.b16 %v59
  %v148 = vunpack.c.l.b16 %v60
  %v149 = vunpack.c.l.b16 %v61
  %v150 = vunpack.c.l.b16 %v62
  %v151 = vunpack.c.l.b16 %v63
  %v152 = vunpack.c.l.b16 %v64
  %v153 = vunpack.c.l.b16 %v65
  %v154 = vunpack.c.l.b16 %v66
  %v155 = vunpack.c.l.b16 %v67
  %v156 = vunpack.c.l.b16 %v68
  %v157 = vpack.c.b16 %v126, %v125
  %v158 = vpack.c.b16 %v128, %v127
  %v159 = vpack.c.b16 %v130, %v129
  %v160 = vpack.c.b16 %v132, %v131
  %v161 = vpack.c.b16 %v134, %v133
  %v162 = vpack.c.b16 %v136, %v135
  %v163 = vpack.c.b16 %v138, %v137
  %v164 = vpack.c.b16 %v140, %v139
  %v165 = vpack.c.b16 %v142, %v141
  %v166 = vpack.c.b16 %v144, %v143
  %v167 = vpack.c.b16 %v146, %v145
  %v168 = vpack.c.b16 %v148, %v147
  %v169 = vpack.c.b16 %v150, %v149
  %v170 = vpack.c.b16 %v152, %v151
  %v171 = vpack.c.b16 %v154, %v153
  %v172 = vpack.c.b16 %v156, %v155
  %189 = vmatpush.bf16.msra.mxu0 %v164
  %190 = vmatpush.bf16.msra.mxu0 %v163
  %191 = vmatpush.bf16.msra.mxu0 %v162
  %192 = vmatpush.bf16.msra.mxu0 %v161
  %193 = vmatpush.bf16.msra.mxu0 %v160
  %194 = vmatpush.bf16.msra.mxu0 %v159
  %195 = vmatpush.bf16.msra.mxu0 %v158
  %196 = vmatpush.bf16.msra.mxu0 %v157
  %197 = vmatmul.bf16.gmra.mxu0 %v85
  %v198 = vpop.f32.mrf.mxu0
  %v199 = vadd.f32 %v69, %v198
  %v200 = vpop.f32.mrf.mxu0
  %v201 = vadd.f32 %v70, %v200
  %202 = vmatmul.bf16.gmra.mxu0 %v87
  %v203 = vpop.f32.mrf.mxu0
  %v204 = vadd.f32 %v71, %v203
  %v205 = vpop.f32.mrf.mxu0
  %v206 = vadd.f32 %v72, %v205
  %207 = vdwg.mxu0
  %208 = vmatpush.bf16.msra.mxu0 %v172
  %209 = vmatpush.bf16.msra.mxu0 %v171
  %210 = vmatpush.bf16.msra.mxu0 %v170
  %211 = vmatpush.bf16.msra.mxu0 %v169
  %212 = vmatpush.bf16.msra.mxu0 %v168
  %213 = vmatpush.bf16.msra.mxu0 %v167
  %214 = vmatpush.bf16.msra.mxu0 %v166
  %215 = vmatpush.bf16.msra.mxu0 %v165
  %216 = vmatmul.bf16.gmra.mxu0 %v86
  %v217 = vpop.f32.mrf.mxu0
  %v218 = vadd.f32 %v199, %v217
  %v219 = vpop.f32.mrf.mxu0
  %v220 = vadd.f32 %v201, %v219
  %221 = vmatmul.bf16.gmra.mxu0 %v88
  %v222 = vpop.f32.mrf.mxu0
  %v223 = vadd.f32 %v204, %v222
  %v224 = vpop.f32.mrf.mxu0
  %v225 = vadd.f32 %v206, %v224
  %226 = vdwg.mxu0
  %v227 = vld [vmem:[%s3] sm:$0xff]
  %v228 = vld [vmem:[%s3 + $0x8] sm:$0xff]
  %v229 = vld [vmem:[%s3 + $0x10] sm:$0xff]
  %v230 = vld [vmem:[%s3 + $0x18] sm:$0xff]
  %v231 = vld [vmem:[%s4] sm:$0xff]
  %vm232 = vcmask 261120
  %v233 = vsel %vm232, %v218, 0.0
  %234 = vadd.xlane.f32.xlu0 %v233
  %v235 = vpop.xlane.xlu0 %234
  %v236 = vsel %vm232, %v220, 0.0
  %237 = vadd.xlane.f32.xlu0 %v236
  %v238 = vpop.xlane.xlu0 %237
  %v239 = vsel %vm232, %v223, 0.0
  %240 = vadd.xlane.f32.xlu0 %v239
  %v241 = vpop.xlane.xlu0 %240
  %v242 = vsel %vm232, %v225, 0.0
  %243 = vadd.xlane.f32.xlu0 %v242
  %v244 = vpop.xlane.xlu0 %243
  %v245 = vmul.f32 %v218, %v218
  %v246 = vmul.f32 %v220, %v220
  %v247 = vmul.f32 %v223, %v223
  %v248 = vmul.f32 %v225, %v225
  %v249 = vsel %vm232, %v245, 0.0
  %250 = vadd.xlane.f32.xlu0 %v249
  %v251 = vpop.xlane.xlu0 %250
  %v252 = vsel %vm232, %v246, 0.0
  %253 = vadd.xlane.f32.xlu0 %v252
  %v254 = vpop.xlane.xlu0 %253
  %v255 = vsel %vm232, %v247, 0.0
  %256 = vadd.xlane.f32.xlu0 %v255
  %v257 = vpop.xlane.xlu0 %256
  %v258 = vsel %vm232, %v248, 0.0
  %259 = vadd.xlane.f32.xlu0 %v258
  %v260 = vpop.xlane.xlu0 %259
  %v261 = vmul.f32 %v235, 0.03125
  %v262 = vmul.f32 %v238, 0.03125
  %v263 = vmul.f32 %v241, 0.03125
  %v264 = vmul.f32 %v244, 0.03125
  %v265 = vmul.f32 %v251, 0.03125
  %v266 = vmul.f32 %v254, 0.03125
  %v267 = vmul.f32 %v257, 0.03125
  %v268 = vmul.f32 %v260, 0.03125
  %v269 = vmul.f32 %v261, %v261
  %v270 = vmul.f32 %v262, %v262
  %v271 = vmul.f32 %v263, %v263
  %v272 = vmul.f32 %v264, %v264
  %v273 = vsub.f32 %v265, %v269
  %v274 = vsub.f32 %v266, %v270
  %v275 = vsub.f32 %v267, %v271
  %v276 = vsub.f32 %v268, %v272
  %v277 = vsub.f32 %v218, %v261
  %v278 = vsub.f32 %v220, %v262
  %v279 = vsub.f32 %v223, %v263
  %v280 = vsub.f32 %v225, %v264
  %v281 = vadd.f32 %v273, 1e-06
  %v282 = vadd.f32 %v274, 1e-06
  %v283 = vadd.f32 %v275, 1e-06
  %v284 = vadd.f32 %v276, 1e-06
  %v285 = vrsqrt.pop %v281
  %v286 = vmul.f32 %v285, %v281
  %v287 = vmul.f32 %v286, %v285
  %v288 = vmul.f32 0.5, %v287
  %v289 = vsub.f32 1.5, %v288
  %v290 = vmul.f32 %v285, %v289
  %vm291 = vweird.f32 %v281
  %vm292 = vweird.f32 %v285
  %vm293 = vmor %vm291, %vm292
  %v294 = vsel %vm293, %v285, %v290
  %v295 = vrsqrt.pop %v282
  %v296 = vmul.f32 %v295, %v282
  %v297 = vmul.f32 %v296, %v295
  %v298 = vmul.f32 0.5, %v297
  %v299 = vsub.f32 1.5, %v298
  %v300 = vmul.f32 %v295, %v299
  %vm301 = vweird.f32 %v282
  %vm302 = vweird.f32 %v295
  %vm303 = vmor %vm301, %vm302
  %v304 = vsel %vm303, %v295, %v300
  %v305 = vrsqrt.pop %v283
  %v306 = vmul.f32 %v305, %v283
  %v307 = vmul.f32 %v306, %v305
  %v308 = vmul.f32 0.5, %v307
  %v309 = vsub.f32 1.5, %v308
  %v310 = vmul.f32 %v305, %v309
  %vm311 = vweird.f32 %v283
  %vm312 = vweird.f32 %v305
  %vm313 = vmor %vm311, %vm312
  %v314 = vsel %vm313, %v305, %v310
  %v315 = vrsqrt.pop %v284
  %v316 = vmul.f32 %v315, %v284
  %v317 = vmul.f32 %v316, %v315
  %v318 = vmul.f32 0.5, %v317
  %v319 = vsub.f32 1.5, %v318
  %v320 = vmul.f32 %v315, %v319
  %vm321 = vweird.f32 %v284
  %vm322 = vweird.f32 %v315
  %vm323 = vmor %vm321, %vm322
  %v324 = vsel %vm323, %v315, %v320
  %v325 = vmul.f32 %v277, %v294
  %v326 = vmul.f32 %v278, %v304
  %v327 = vmul.f32 %v279, %v314
  %v328 = vmul.f32 %v280, %v324
  %v329 = vperm.slane %v231, 0
  %v330 = vmul.f32 %v325, %v329
  %v331 = vmul.f32 %v326, %v329
  %v332 = vmul.f32 %v327, %v329
  %v333 = vmul.f32 %v328, %v329
  %v334 = vperm.slane %v231, 1
  %v335 = vadd.f32 %v330, %v334
  %v336 = vadd.f32 %v331, %v334
  %v337 = vadd.f32 %v332, %v334
  %v338 = vadd.f32 %v333, %v334
  %v339 = vpack.c.bf16 %v336, %v335
  %v340 = vpack.c.bf16 %v338, %v337
  %v341 = vld [vmem:[%s5] sm:$0xf]
  %v342 = vld [vmem:[%s5 + $0x4] sm:$0xf]
  %v343 = vld [vmem:[%s5 + $0x8] sm:$0xf]
  %v344 = vld [vmem:[%s5 + $0xc] sm:$0xf]
  %v345 = vperm.slane %v231, 2
  %v350 = vunpack.c.l.b16 %v341
  %v351 = vunpack.c.l.b16 %v342
  %v352 = vunpack.c.l.b16 %v343
  %v353 = vunpack.c.l.b16 %v344
  %v354 = vpack.c.b16 %v351, %v350
  %v355 = vpack.c.b16 %v353, %v352
  %v359 = vsel %vm232, %v339, 0
  %v362 = vsel %vm232, %v340, 0
  %364 = vmatpush.bf16.msra.mxu0 0
  %365 = vmatpush.bf16.msra.mxu0 0
  %366 = vmatpush.bf16.msra.mxu0 0
  %367 = vmatpush.bf16.msra.mxu0 0
  %368 = vmatpush.bf16.msra.mxu0 0
  %369 = vmatpush.bf16.msra.mxu0 0
  %370 = vmatpush.bf16.msra.mxu0 %v355
  %371 = vmatpush.bf16.msra.mxu0 %v354
  %372 = vmatmul.bf16.gmra.mxu0 %v359
  %v373 = vpop.f32.mrf.mxu0
  %v374 = vadd.f32 %v345, %v373
  %v375 = vpop.f32.mrf.mxu0
  %v376 = vadd.f32 %v345, %v375
  %377 = vmatmul.bf16.gmra.mxu0 %v362
  %v378 = vpop.f32.mrf.mxu0
  %v379 = vadd.f32 %v345, %v378
  %v380 = vpop.f32.mrf.mxu0
  %v381 = vadd.f32 %v345, %v380
  %382 = vdwg.mxu0
  %v383 = vpack.c.bf16 %v376, %v374
  %v384 = vpack.c.bf16 %v381, %v379
  %387 = vrot.lane.b32.xlu0 %v383, 96
  %v388 = vpop.permute.xlu0 %387
  %389 = vrot.lane.b32.xlu0 %v384, 96
  %v390 = vpop.permute.xlu0 %389
  %vm391 = vcmask 64512
  %v393 = vsel %vm391, %v383, 0
  %v396 = vsel %vm391, %v384, 0
  %v399 = vsel %vm391, %v388, 0
  %v402 = vsel %vm391, %v390, 0
  %404 = vmatpush.bf16.xpose.msra.mxu0 0
  %405 = vmatpush.bf16.xpose.msra.mxu0 0
  %406 = vmatpush.bf16.xpose.msra.mxu0 0
  %407 = vmatpush.bf16.xpose.msra.mxu0 0
  %408 = vmatpush.bf16.xpose.msra.mxu0 0
  %409 = vmatpush.bf16.xpose.msra.mxu0 0
  %410 = vmatpush.bf16.xpose.msra.mxu0 %v402
  %411 = vmatpush.bf16.xpose.msra.mxu0 %v399
  %412 = vmatmul.bf16.gmra.mxu0 %v393
  %v413 = vpop.f32.mrf.mxu0
  %v414 = vadd.f32 %v227, %v413
  %v415 = vpop.f32.mrf.mxu0
  %v416 = vadd.f32 %v228, %v415
  %417 = vmatmul.bf16.gmra.mxu0 %v396
  %v418 = vpop.f32.mrf.mxu0
  %v419 = vadd.f32 %v229, %v418
  %v420 = vpop.f32.mrf.mxu0
  %v421 = vadd.f32 %v230, %v420
  %422 = vdwg.mxu0
  %v423 = vsel %vm232, %v414, -inf
  %424 = vmax.xlane.f32.xlu0 %v423
  %v425 = vpop.xlane.xlu0 %424
  %v426 = vsel %vm232, %v416, -inf
  %427 = vmax.xlane.f32.xlu0 %v426
  %v428 = vpop.xlane.xlu0 %427
  %v429 = vsel %vm232, %v419, -inf
  %430 = vmax.xlane.f32.xlu0 %v429
  %v431 = vpop.xlane.xlu0 %430
  %v432 = vsel %vm232, %v421, -inf
  %433 = vmax.xlane.f32.xlu0 %v432
  %v434 = vpop.xlane.xlu0 %433
  %v435 = vsub.f32 %v414, %v425
  %v436 = vsub.f32 %v416, %v428
  %v437 = vsub.f32 %v419, %v431
  %v438 = vsub.f32 %v421, %v434
  %v439 = vmul.f32 %v435, 1.442695
  %v440 = vpow.pop %v439
  %v441 = vmul.f32 %v436, 1.442695
  %v442 = vpow.pop %v441
  %v443 = vmul.f32 %v437, 1.442695
  %v444 = vpow.pop %v443
  %v445 = vmul.f32 %v438, 1.442695
  %v446 = vpow.pop %v445
  %v447 = vsel %vm232, %v440, 0.0
  %448 = vadd.xlane.f32.xlu0 %v447
  %v449 = vpop.xlane.xlu0 %448
  %v450 = vsel %vm232, %v442, 0.0
  %451 = vadd.xlane.f32.xlu0 %v450
  %v452 = vpop.xlane.xlu0 %451
  %v453 = vsel %vm232, %v444, 0.0
  %454 = vadd.xlane.f32.xlu0 %v453
  %v455 = vpop.xlane.xlu0 %454
  %v456 = vsel %vm232, %v446, 0.0
  %457 = vadd.xlane.f32.xlu0 %v456
  %v458 = vpop.xlane.xlu0 %457
  %v459 = vpack.c.bf16 %v442, %v440
  %v460 = vpack.c.bf16 %v446, %v444
  %461 = vrot.lane.b32.xlu0 %v383, 64
  %v462 = vpop.permute.xlu0 %461
  %463 = vrot.lane.b32.xlu0 %v384, 64
  %v464 = vpop.permute.xlu0 %463
  %v468 = vsel %vm232, %v459, 0
  %v471 = vsel %vm232, %v460, 0
  %473 = vmatpush.bf16.msra.mxu0 0
  %474 = vmatpush.bf16.msra.mxu0 0
  %475 = vmatpush.bf16.msra.mxu0 0
  %476 = vmatpush.bf16.msra.mxu0 0
  %477 = vmatpush.bf16.msra.mxu0 0
  %478 = vmatpush.bf16.msra.mxu0 0
  %479 = vmatpush.bf16.msra.mxu0 %v464
  %480 = vmatpush.bf16.msra.mxu0 %v462
  %481 = vmatmul.bf16.gmra.mxu0 %v468
  %v482 = vpop.f32.mrf.mxu0
  %v483 = vadd.f32 0.0, %v482
  %v484 = vpop.f32.mrf.mxu0
  %v485 = vadd.f32 0.0, %v484
  %486 = vmatmul.bf16.gmra.mxu0 %v471
  %v487 = vpop.f32.mrf.mxu0
  %v488 = vadd.f32 0.0, %v487
  %v489 = vpop.f32.mrf.mxu0
  %v490 = vadd.f32 0.0, %v489
  %491 = vdwg.mxu0
  %v492 = vrcp.pop %v449
  %v493 = vrcp.pop %v452
  %v494 = vrcp.pop %v455
  %v495 = vrcp.pop %v458
  %v496 = vmul.f32 %v483, %v492
  %v497 = vmul.f32 %v485, %v493
  %v498 = vmul.f32 %v488, %v494
  %v499 = vmul.f32 %v490, %v495
  %500 = vrot.lane.b32.xlu0 %v383, 120
  %v501 = vpop.permute.xlu0 %500
  %502 = vrot.lane.b32.xlu0 %v384, 120
  %v503 = vpop.permute.xlu0 %502
  %504 = vrot.lane.b32.xlu0 %v383, 88
  %v505 = vpop.permute.xlu0 %504
  %506 = vrot.lane.b32.xlu0 %v384, 88
  %v507 = vpop.permute.xlu0 %506
  %v509 = vsel %vm391, %v501, 0
  %v512 = vsel %vm391, %v503, 0
  %v515 = vsel %vm391, %v505, 0
  %v518 = vsel %vm391, %v507, 0
  %520 = vmatpush.bf16.xpose.msra.mxu0 0
  %521 = vmatpush.bf16.xpose.msra.mxu0 0
  %522 = vmatpush.bf16.xpose.msra.mxu0 0
  %523 = vmatpush.bf16.xpose.msra.mxu0 0
  %524 = vmatpush.bf16.xpose.msra.mxu0 0
  %525 = vmatpush.bf16.xpose.msra.mxu0 0
  %526 = vmatpush.bf16.xpose.msra.mxu0 %v518
  %527 = vmatpush.bf16.xpose.msra.mxu0 %v515
  %528 = vmatmul.bf16.gmra.mxu0 %v509
  %v529 = vpop.f32.mrf.mxu0
  %v530 = vadd.f32 %v227, %v529
  %v531 = vpop.f32.mrf.mxu0
  %v532 = vadd.f32 %v228, %v531
  %533 = vmatmul.bf16.gmra.mxu0 %v512
  %v534 = vpop.f32.mrf.mxu0
  %v535 = vadd.f32 %v229, %v534
  %v536 = vpop.f32.mrf.mxu0
  %v537 = vadd.f32 %v230, %v536
  %538 = vdwg.mxu0
  %v539 = vsel %vm232, %v530, -inf
  %540 = vmax.xlane.f32.xlu0 %v539
  %v541 = vpop.xlane.xlu0 %540
  %v542 = vsel %vm232, %v532, -inf
  %543 = vmax.xlane.f32.xlu0 %v542
  %v544 = vpop.xlane.xlu0 %543
  %v545 = vsel %vm232, %v535, -inf
  %546 = vmax.xlane.f32.xlu0 %v545
  %v547 = vpop.xlane.xlu0 %546
  %v548 = vsel %vm232, %v537, -inf
  %549 = vmax.xlane.f32.xlu0 %v548
  %v550 = vpop.xlane.xlu0 %549
  %v551 = vsub.f32 %v530, %v541
  %v552 = vsub.f32 %v532, %v544
  %v553 = vsub.f32 %v535, %v547
  %v554 = vsub.f32 %v537, %v550
  %v555 = vmul.f32 %v551, 1.442695
  %v556 = vpow.pop %v555
  %v557 = vmul.f32 %v552, 1.442695
  %v558 = vpow.pop %v557
  %v559 = vmul.f32 %v553, 1.442695
  %v560 = vpow.pop %v559
  %v561 = vmul.f32 %v554, 1.442695
  %v562 = vpow.pop %v561
  %v563 = vsel %vm232, %v556, 0.0
  %564 = vadd.xlane.f32.xlu0 %v563
  %v565 = vpop.xlane.xlu0 %564
  %v566 = vsel %vm232, %v558, 0.0
  %567 = vadd.xlane.f32.xlu0 %v566
  %v568 = vpop.xlane.xlu0 %567
  %v569 = vsel %vm232, %v560, 0.0
  %570 = vadd.xlane.f32.xlu0 %v569
  %v571 = vpop.xlane.xlu0 %570
  %v572 = vsel %vm232, %v562, 0.0
  %573 = vadd.xlane.f32.xlu0 %v572
  %v574 = vpop.xlane.xlu0 %573
  %v575 = vpack.c.bf16 %v558, %v556
  %v576 = vpack.c.bf16 %v562, %v560
  %577 = vrot.lane.b32.xlu0 %v383, 56
  %v578 = vpop.permute.xlu0 %577
  %579 = vrot.lane.b32.xlu0 %v384, 56
  %v580 = vpop.permute.xlu0 %579
  %v584 = vsel %vm232, %v575, 0
  %v587 = vsel %vm232, %v576, 0
  %589 = vmatpush.bf16.msra.mxu0 0
  %590 = vmatpush.bf16.msra.mxu0 0
  %591 = vmatpush.bf16.msra.mxu0 0
  %592 = vmatpush.bf16.msra.mxu0 0
  %593 = vmatpush.bf16.msra.mxu0 0
  %594 = vmatpush.bf16.msra.mxu0 0
  %595 = vmatpush.bf16.msra.mxu0 %v580
  %596 = vmatpush.bf16.msra.mxu0 %v578
  %597 = vmatmul.bf16.gmra.mxu0 %v584
  %v598 = vpop.f32.mrf.mxu0
  %v599 = vadd.f32 0.0, %v598
  %v600 = vpop.f32.mrf.mxu0
  %v601 = vadd.f32 0.0, %v600
  %602 = vmatmul.bf16.gmra.mxu0 %v587
  %v603 = vpop.f32.mrf.mxu0
  %v604 = vadd.f32 0.0, %v603
  %v605 = vpop.f32.mrf.mxu0
  %v606 = vadd.f32 0.0, %v605
  %607 = vdwg.mxu0
  %v608 = vrcp.pop %v565
  %v609 = vrcp.pop %v568
  %v610 = vrcp.pop %v571
  %v611 = vrcp.pop %v574
  %v612 = vmul.f32 %v599, %v608
  %v613 = vmul.f32 %v601, %v609
  %v614 = vmul.f32 %v604, %v610
  %v615 = vmul.f32 %v606, %v611
  %616 = vrot.lane.b32.xlu0 %v383, 112
  %v617 = vpop.permute.xlu0 %616
  %618 = vrot.lane.b32.xlu0 %v384, 112
  %v619 = vpop.permute.xlu0 %618
  %620 = vrot.lane.b32.xlu0 %v383, 80
  %v621 = vpop.permute.xlu0 %620
  %622 = vrot.lane.b32.xlu0 %v384, 80
  %v623 = vpop.permute.xlu0 %622
  %v625 = vsel %vm391, %v617, 0
  %v628 = vsel %vm391, %v619, 0
  %v631 = vsel %vm391, %v621, 0
  %v634 = vsel %vm391, %v623, 0
  %636 = vmatpush.bf16.xpose.msra.mxu0 0
  %637 = vmatpush.bf16.xpose.msra.mxu0 0
  %638 = vmatpush.bf16.xpose.msra.mxu0 0
  %639 = vmatpush.bf16.xpose.msra.mxu0 0
  %640 = vmatpush.bf16.xpose.msra.mxu0 0
  %641 = vmatpush.bf16.xpose.msra.mxu0 0
  %642 = vmatpush.bf16.xpose.msra.mxu0 %v634
  %643 = vmatpush.bf16.xpose.msra.mxu0 %v631
  %644 = vmatmul.bf16.gmra.mxu0 %v625
  %v645 = vpop.f32.mrf.mxu0
  %v646 = vadd.f32 %v227, %v645
  %v647 = vpop.f32.mrf.mxu0
  %v648 = vadd.f32 %v228, %v647
  %649 = vmatmul.bf16.gmra.mxu0 %v628
  %v650 = vpop.f32.mrf.mxu0
  %v651 = vadd.f32 %v229, %v650
  %v652 = vpop.f32.mrf.mxu0
  %v653 = vadd.f32 %v230, %v652
  %654 = vdwg.mxu0
  %v655 = vsel %vm232, %v646, -inf
  %656 = vmax.xlane.f32.xlu0 %v655
  %v657 = vpop.xlane.xlu0 %656
  %v658 = vsel %vm232, %v648, -inf
  %659 = vmax.xlane.f32.xlu0 %v658
  %v660 = vpop.xlane.xlu0 %659
  %v661 = vsel %vm232, %v651, -inf
  %662 = vmax.xlane.f32.xlu0 %v661
  %v663 = vpop.xlane.xlu0 %662
  %v664 = vsel %vm232, %v653, -inf
  %665 = vmax.xlane.f32.xlu0 %v664
  %v666 = vpop.xlane.xlu0 %665
  %v667 = vsub.f32 %v646, %v657
  %v668 = vsub.f32 %v648, %v660
  %v669 = vsub.f32 %v651, %v663
  %v670 = vsub.f32 %v653, %v666
  %v671 = vmul.f32 %v667, 1.442695
  %v672 = vpow.pop %v671
  %v673 = vmul.f32 %v668, 1.442695
  %v674 = vpow.pop %v673
  %v675 = vmul.f32 %v669, 1.442695
  %v676 = vpow.pop %v675
  %v677 = vmul.f32 %v670, 1.442695
  %v678 = vpow.pop %v677
  %v679 = vsel %vm232, %v672, 0.0
  %680 = vadd.xlane.f32.xlu0 %v679
  %v681 = vpop.xlane.xlu0 %680
  %v682 = vsel %vm232, %v674, 0.0
  %683 = vadd.xlane.f32.xlu0 %v682
  %v684 = vpop.xlane.xlu0 %683
  %v685 = vsel %vm232, %v676, 0.0
  %686 = vadd.xlane.f32.xlu0 %v685
  %v687 = vpop.xlane.xlu0 %686
  %v688 = vsel %vm232, %v678, 0.0
  %689 = vadd.xlane.f32.xlu0 %v688
  %v690 = vpop.xlane.xlu0 %689
  %v691 = vpack.c.bf16 %v674, %v672
  %v692 = vpack.c.bf16 %v678, %v676
  %693 = vrot.lane.b32.xlu0 %v383, 48
  %v694 = vpop.permute.xlu0 %693
  %695 = vrot.lane.b32.xlu0 %v384, 48
  %v696 = vpop.permute.xlu0 %695
  %v700 = vsel %vm232, %v691, 0
  %v703 = vsel %vm232, %v692, 0
  %705 = vmatpush.bf16.msra.mxu0 0
  %706 = vmatpush.bf16.msra.mxu0 0
  %707 = vmatpush.bf16.msra.mxu0 0
  %708 = vmatpush.bf16.msra.mxu0 0
  %709 = vmatpush.bf16.msra.mxu0 0
  %710 = vmatpush.bf16.msra.mxu0 0
  %711 = vmatpush.bf16.msra.mxu0 %v696
  %712 = vmatpush.bf16.msra.mxu0 %v694
  %713 = vmatmul.bf16.gmra.mxu0 %v700
  %v714 = vpop.f32.mrf.mxu0
  %v715 = vadd.f32 0.0, %v714
  %v716 = vpop.f32.mrf.mxu0
  %v717 = vadd.f32 0.0, %v716
  %718 = vmatmul.bf16.gmra.mxu0 %v703
  %v719 = vpop.f32.mrf.mxu0
  %v720 = vadd.f32 0.0, %v719
  %v721 = vpop.f32.mrf.mxu0
  %v722 = vadd.f32 0.0, %v721
  %723 = vdwg.mxu0
  %v724 = vrcp.pop %v681
  %v725 = vrcp.pop %v684
  %v726 = vrcp.pop %v687
  %v727 = vrcp.pop %v690
  %v728 = vmul.f32 %v715, %v724
  %v729 = vmul.f32 %v717, %v725
  %v730 = vmul.f32 %v720, %v726
  %v731 = vmul.f32 %v722, %v727
  %732 = vrot.lane.b32.xlu0 %v383, 104
  %v733 = vpop.permute.xlu0 %732
  %734 = vrot.lane.b32.xlu0 %v384, 104
  %v735 = vpop.permute.xlu0 %734
  %736 = vrot.lane.b32.xlu0 %v383, 72
  %v737 = vpop.permute.xlu0 %736
  %738 = vrot.lane.b32.xlu0 %v384, 72
  %v739 = vpop.permute.xlu0 %738
  %v741 = vsel %vm391, %v733, 0
  %v744 = vsel %vm391, %v735, 0
  %v747 = vsel %vm391, %v737, 0
  %v750 = vsel %vm391, %v739, 0
  %752 = vmatpush.bf16.xpose.msra.mxu0 0
  %753 = vmatpush.bf16.xpose.msra.mxu0 0
  %754 = vmatpush.bf16.xpose.msra.mxu0 0
  %755 = vmatpush.bf16.xpose.msra.mxu0 0
  %756 = vmatpush.bf16.xpose.msra.mxu0 0
  %757 = vmatpush.bf16.xpose.msra.mxu0 0
  %758 = vmatpush.bf16.xpose.msra.mxu0 %v750
  %759 = vmatpush.bf16.xpose.msra.mxu0 %v747
  %760 = vmatmul.bf16.gmra.mxu0 %v741
  %v761 = vpop.f32.mrf.mxu0
  %v762 = vadd.f32 %v227, %v761
  %v763 = vpop.f32.mrf.mxu0
  %v764 = vadd.f32 %v228, %v763
  %765 = vmatmul.bf16.gmra.mxu0 %v744
  %v766 = vpop.f32.mrf.mxu0
  %v767 = vadd.f32 %v229, %v766
  %v768 = vpop.f32.mrf.mxu0
  %v769 = vadd.f32 %v230, %v768
  %770 = vdwg.mxu0
  %v771 = vsel %vm232, %v762, -inf
  %772 = vmax.xlane.f32.xlu0 %v771
  %v773 = vpop.xlane.xlu0 %772
  %v774 = vsel %vm232, %v764, -inf
  %775 = vmax.xlane.f32.xlu0 %v774
  %v776 = vpop.xlane.xlu0 %775
  %v777 = vsel %vm232, %v767, -inf
  %778 = vmax.xlane.f32.xlu0 %v777
  %v779 = vpop.xlane.xlu0 %778
  %v780 = vsel %vm232, %v769, -inf
  %781 = vmax.xlane.f32.xlu0 %v780
  %v782 = vpop.xlane.xlu0 %781
  %v783 = vsub.f32 %v762, %v773
  %v784 = vsub.f32 %v764, %v776
  %v785 = vsub.f32 %v767, %v779
  %v786 = vsub.f32 %v769, %v782
  %v787 = vmul.f32 %v783, 1.442695
  %v788 = vpow.pop %v787
  %v789 = vmul.f32 %v784, 1.442695
  %v790 = vpow.pop %v789
  %v791 = vmul.f32 %v785, 1.442695
  %v792 = vpow.pop %v791
  %v793 = vmul.f32 %v786, 1.442695
  %v794 = vpow.pop %v793
  %v795 = vsel %vm232, %v788, 0.0
  %796 = vadd.xlane.f32.xlu0 %v795
  %v797 = vpop.xlane.xlu0 %796
  %v798 = vsel %vm232, %v790, 0.0
  %799 = vadd.xlane.f32.xlu0 %v798
  %v800 = vpop.xlane.xlu0 %799
  %v801 = vsel %vm232, %v792, 0.0
  %802 = vadd.xlane.f32.xlu0 %v801
  %v803 = vpop.xlane.xlu0 %802
  %v804 = vsel %vm232, %v794, 0.0
  %805 = vadd.xlane.f32.xlu0 %v804
  %v806 = vpop.xlane.xlu0 %805
  %v807 = vpack.c.bf16 %v790, %v788
  %v808 = vpack.c.bf16 %v794, %v792
  %809 = vrot.lane.b32.xlu0 %v383, 40
  %v810 = vpop.permute.xlu0 %809
  %811 = vrot.lane.b32.xlu0 %v384, 40
  %v812 = vpop.permute.xlu0 %811
  %v816 = vsel %vm232, %v807, 0
  %v819 = vsel %vm232, %v808, 0
  %821 = vmatpush.bf16.msra.mxu0 0
  %822 = vmatpush.bf16.msra.mxu0 0
  %823 = vmatpush.bf16.msra.mxu0 0
  %824 = vmatpush.bf16.msra.mxu0 0
  %825 = vmatpush.bf16.msra.mxu0 0
  %826 = vmatpush.bf16.msra.mxu0 0
  %827 = vmatpush.bf16.msra.mxu0 %v812
  %828 = vmatpush.bf16.msra.mxu0 %v810
  %829 = vmatmul.bf16.gmra.mxu0 %v816
  %v830 = vpop.f32.mrf.mxu0
  %v831 = vadd.f32 0.0, %v830
  %v832 = vpop.f32.mrf.mxu0
  %v833 = vadd.f32 0.0, %v832
  %834 = vmatmul.bf16.gmra.mxu0 %v819
  %v835 = vpop.f32.mrf.mxu0
  %v836 = vadd.f32 0.0, %v835
  %v837 = vpop.f32.mrf.mxu0
  %v838 = vadd.f32 0.0, %v837
  %839 = vdwg.mxu0
  %v840 = vrcp.pop %v797
  %v841 = vrcp.pop %v800
  %v842 = vrcp.pop %v803
  %v843 = vrcp.pop %v806
  %v844 = vmul.f32 %v831, %v840
  %v845 = vmul.f32 %v833, %v841
  %v846 = vmul.f32 %v836, %v842
  %v847 = vmul.f32 %v838, %v843
  %852 = vrot.lane.b32.xlu0 %v612, 8
  %v853 = vpop.permute.xlu0 %852
  %854 = vrot.lane.b32.xlu0 %v613, 8
  %v855 = vpop.permute.xlu0 %854
  %856 = vrot.lane.b32.xlu0 %v614, 8
  %v857 = vpop.permute.xlu0 %856
  %858 = vrot.lane.b32.xlu0 %v615, 8
  %v859 = vpop.permute.xlu0 %858
  %868 = vrot.lane.b32.xlu0 %v728, 16
  %v869 = vpop.permute.xlu0 %868
  %870 = vrot.lane.b32.xlu0 %v729, 16
  %v871 = vpop.permute.xlu0 %870
  %872 = vrot.lane.b32.xlu0 %v730, 16
  %v873 = vpop.permute.xlu0 %872
  %874 = vrot.lane.b32.xlu0 %v731, 16
  %v875 = vpop.permute.xlu0 %874
  %884 = vrot.lane.b32.xlu0 %v844, 24
  %v885 = vpop.permute.xlu0 %884
  %886 = vrot.lane.b32.xlu0 %v845, 24
  %v887 = vpop.permute.xlu0 %886
  %888 = vrot.lane.b32.xlu0 %v846, 24
  %v889 = vpop.permute.xlu0 %888
  %890 = vrot.lane.b32.xlu0 %v847, 24
  %v891 = vpop.permute.xlu0 %890
  %v896 = vsel %vm391, %v496, %v853
  %v897 = vsel %vm391, %v497, %v855
  %v898 = vsel %vm391, %v498, %v857
  %v899 = vsel %vm391, %v499, %v859
  %vm900 = vcmask 130048
  %v901 = vsel %vm900, %v896, %v869
  %v902 = vsel %vm900, %v897, %v871
  %v903 = vsel %vm900, %v898, %v873
  %v904 = vsel %vm900, %v899, %v875
  %vm905 = vcmask 195584
  %v906 = vsel %vm905, %v901, %v885
  %v907 = vsel %vm905, %v902, %v887
  %v908 = vsel %vm905, %v903, %v889
  %v909 = vsel %vm905, %v904, %v891
  %v910 = vpack.c.bf16 %v907, %v906
  %v911 = vpack.c.bf16 %v909, %v908
  %v912 = vld [vmem:[%s6] sm:$0xf]
  %v913 = vld [vmem:[%s6 + $0x4] sm:$0xf]
  %v914 = vld [vmem:[%s6 + $0x8] sm:$0xf]
  %v915 = vld [vmem:[%s6 + $0xc] sm:$0xf]
  %v920 = vunpack.c.l.b16 %v912
  %v921 = vunpack.c.l.b16 %v913
  %v922 = vunpack.c.l.b16 %v914
  %v923 = vunpack.c.l.b16 %v915
  %v924 = vpack.c.b16 %v921, %v920
  %v925 = vpack.c.b16 %v923, %v922
  %v929 = vsel %vm232, %v910, 0
  %v932 = vsel %vm232, %v911, 0
  %934 = vmatpush.bf16.msra.mxu0 0
  %935 = vmatpush.bf16.msra.mxu0 0
  %936 = vmatpush.bf16.msra.mxu0 0
  %937 = vmatpush.bf16.msra.mxu0 0
  %938 = vmatpush.bf16.msra.mxu0 0
  %939 = vmatpush.bf16.msra.mxu0 0
  %940 = vmatpush.bf16.msra.mxu0 %v925
  %941 = vmatpush.bf16.msra.mxu0 %v924
  %942 = vmatmul.bf16.gmra.mxu0 %v929
  %v943 = vpop.f32.mrf.mxu0
  %v944 = vadd.f32 0.0, %v943
  %v945 = vpop.f32.mrf.mxu0
  %v946 = vadd.f32 0.0, %v945
  %947 = vmatmul.bf16.gmra.mxu0 %v932
  %v948 = vpop.f32.mrf.mxu0
  %v949 = vadd.f32 0.0, %v948
  %v950 = vpop.f32.mrf.mxu0
  %v951 = vadd.f32 0.0, %v950
  %952 = vdwg.mxu0
  %v953 = vadd.f32 %v218, %v944
  %v954 = vadd.f32 %v220, %v946
  %v955 = vadd.f32 %v223, %v949
  %v956 = vadd.f32 %v225, %v951
  %v957 = vperm.slane %v231, 3
  %v958 = vadd.f32 %v953, %v957
  %v959 = vadd.f32 %v954, %v957
  %v960 = vadd.f32 %v955, %v957
  %v961 = vadd.f32 %v956, %v957
  %v962 = vsel %vm232, %v958, 0.0
  %963 = vadd.xlane.f32.xlu0 %v962
  %v964 = vpop.xlane.xlu0 %963
  %v965 = vsel %vm232, %v959, 0.0
  %966 = vadd.xlane.f32.xlu0 %v965
  %v967 = vpop.xlane.xlu0 %966
  %v968 = vsel %vm232, %v960, 0.0
  %969 = vadd.xlane.f32.xlu0 %v968
  %v970 = vpop.xlane.xlu0 %969
  %v971 = vsel %vm232, %v961, 0.0
  %972 = vadd.xlane.f32.xlu0 %v971
  %v973 = vpop.xlane.xlu0 %972
  %v974 = vmul.f32 %v958, %v958
  %v975 = vmul.f32 %v959, %v959
  %v976 = vmul.f32 %v960, %v960
  %v977 = vmul.f32 %v961, %v961
  %v978 = vsel %vm232, %v974, 0.0
  %979 = vadd.xlane.f32.xlu0 %v978
  %v980 = vpop.xlane.xlu0 %979
  %v981 = vsel %vm232, %v975, 0.0
  %982 = vadd.xlane.f32.xlu0 %v981
  %v983 = vpop.xlane.xlu0 %982
  %v984 = vsel %vm232, %v976, 0.0
  %985 = vadd.xlane.f32.xlu0 %v984
  %v986 = vpop.xlane.xlu0 %985
  %v987 = vsel %vm232, %v977, 0.0
  %988 = vadd.xlane.f32.xlu0 %v987
  %v989 = vpop.xlane.xlu0 %988
  %v990 = vmul.f32 %v964, 0.03125
  %v991 = vmul.f32 %v967, 0.03125
  %v992 = vmul.f32 %v970, 0.03125
  %v993 = vmul.f32 %v973, 0.03125
  %v994 = vmul.f32 %v980, 0.03125
  %v995 = vmul.f32 %v983, 0.03125
  %v996 = vmul.f32 %v986, 0.03125
  %v997 = vmul.f32 %v989, 0.03125
  %v998 = vmul.f32 %v990, %v990
  %v999 = vmul.f32 %v991, %v991
  %v1000 = vmul.f32 %v992, %v992
  %v1001 = vmul.f32 %v993, %v993
  %v1002 = vsub.f32 %v994, %v998
  %v1003 = vsub.f32 %v995, %v999
  %v1004 = vsub.f32 %v996, %v1000
  %v1005 = vsub.f32 %v997, %v1001
  %v1006 = vsub.f32 %v958, %v990
  %v1007 = vsub.f32 %v959, %v991
  %v1008 = vsub.f32 %v960, %v992
  %v1009 = vsub.f32 %v961, %v993
  %v1010 = vadd.f32 %v1002, 1e-06
  %v1011 = vadd.f32 %v1003, 1e-06
  %v1012 = vadd.f32 %v1004, 1e-06
  %v1013 = vadd.f32 %v1005, 1e-06
  %v1014 = vrsqrt.pop %v1010
  %v1015 = vmul.f32 %v1014, %v1010
  %v1016 = vmul.f32 %v1015, %v1014
  %v1017 = vmul.f32 0.5, %v1016
  %v1018 = vsub.f32 1.5, %v1017
  %v1019 = vmul.f32 %v1014, %v1018
  %vm1020 = vweird.f32 %v1010
  %vm1021 = vweird.f32 %v1014
  %vm1022 = vmor %vm1020, %vm1021
  %v1023 = vsel %vm1022, %v1014, %v1019
  %v1024 = vrsqrt.pop %v1011
  %v1025 = vmul.f32 %v1024, %v1011
  %v1026 = vmul.f32 %v1025, %v1024
  %v1027 = vmul.f32 0.5, %v1026
  %v1028 = vsub.f32 1.5, %v1027
  %v1029 = vmul.f32 %v1024, %v1028
  %vm1030 = vweird.f32 %v1011
  %vm1031 = vweird.f32 %v1024
  %vm1032 = vmor %vm1030, %vm1031
  %v1033 = vsel %vm1032, %v1024, %v1029
  %v1034 = vrsqrt.pop %v1012
  %v1035 = vmul.f32 %v1034, %v1012
  %v1036 = vmul.f32 %v1035, %v1034
  %v1037 = vmul.f32 0.5, %v1036
  %v1038 = vsub.f32 1.5, %v1037
  %v1039 = vmul.f32 %v1034, %v1038
  %vm1040 = vweird.f32 %v1012
  %vm1041 = vweird.f32 %v1034
  %vm1042 = vmor %vm1040, %vm1041
  %v1043 = vsel %vm1042, %v1034, %v1039
  %v1044 = vrsqrt.pop %v1013
  %v1045 = vmul.f32 %v1044, %v1013
  %v1046 = vmul.f32 %v1045, %v1044
  %v1047 = vmul.f32 0.5, %v1046
  %v1048 = vsub.f32 1.5, %v1047
  %v1049 = vmul.f32 %v1044, %v1048
  %vm1050 = vweird.f32 %v1013
  %vm1051 = vweird.f32 %v1044
  %vm1052 = vmor %vm1050, %vm1051
  %v1053 = vsel %vm1052, %v1044, %v1049
  %v1054 = vmul.f32 %v1006, %v1023
  %v1055 = vmul.f32 %v1007, %v1033
  %v1056 = vmul.f32 %v1008, %v1043
  %v1057 = vmul.f32 %v1009, %v1053
  %v1058 = vperm.slane %v231, 4
  %v1059 = vmul.f32 %v1054, %v1058
  %v1060 = vmul.f32 %v1055, %v1058
  %v1061 = vmul.f32 %v1056, %v1058
  %v1062 = vmul.f32 %v1057, %v1058
  %v1063 = vperm.slane %v231, 5
  %v1064 = vadd.f32 %v1059, %v1063
  %v1065 = vadd.f32 %v1060, %v1063
  %v1066 = vadd.f32 %v1061, %v1063
  %v1067 = vadd.f32 %v1062, %v1063
  %v1068 = vpack.c.bf16 %v1065, %v1064
  %v1069 = vpack.c.bf16 %v1067, %v1066
  %v1070 = vld [vmem:[%s7] sm:$0xf]
  %v1071 = vld [vmem:[%s7 + $0x4] sm:$0xf]
  %v1072 = vld [vmem:[%s7 + $0x8] sm:$0xf]
  %v1073 = vld [vmem:[%s7 + $0xc] sm:$0xf]
  %v1074 = vperm.slane %v231, 6
  %v1079 = vunpack.c.l.b16 %v1070
  %v1080 = vunpack.c.l.b16 %v1071
  %v1081 = vunpack.c.l.b16 %v1072
  %v1082 = vunpack.c.l.b16 %v1073
  %v1083 = vpack.c.b16 %v1080, %v1079
  %v1084 = vpack.c.b16 %v1082, %v1081
  %v1088 = vsel %vm232, %v1068, 0
  %v1091 = vsel %vm232, %v1069, 0
  %1093 = vmatpush.bf16.msra.mxu0 0
  %1094 = vmatpush.bf16.msra.mxu0 0
  %1095 = vmatpush.bf16.msra.mxu0 0
  %1096 = vmatpush.bf16.msra.mxu0 0
  %1097 = vmatpush.bf16.msra.mxu0 0
  %1098 = vmatpush.bf16.msra.mxu0 0
  %1099 = vmatpush.bf16.msra.mxu0 %v1084
  %1100 = vmatpush.bf16.msra.mxu0 %v1083
  %1101 = vmatmul.bf16.gmra.mxu0 %v1088
  %v1102 = vpop.f32.mrf.mxu0
  %v1103 = vadd.f32 %v1074, %v1102
  %v1104 = vpop.f32.mrf.mxu0
  %v1105 = vadd.f32 %v1074, %v1104
  %1106 = vmatmul.bf16.gmra.mxu0 %v1091
  %v1107 = vpop.f32.mrf.mxu0
  %v1108 = vadd.f32 %v1074, %v1107
  %v1109 = vpop.f32.mrf.mxu0
  %v1110 = vadd.f32 %v1074, %v1109
  %1111 = vdwg.mxu0
  %v1112 = vmul.f32 %v1103, %v1103
  %v1113 = vmul.f32 %v1105, %v1105
  %v1114 = vmul.f32 %v1108, %v1108
  %v1115 = vmul.f32 %v1110, %v1110
  %v1116 = vmul.f32 %v1103, %v1112
  %v1117 = vmul.f32 %v1105, %v1113
  %v1118 = vmul.f32 %v1108, %v1114
  %v1119 = vmul.f32 %v1110, %v1115
  %v1120 = vmul.f32 %v1116, 0.044715
  %v1121 = vmul.f32 %v1117, 0.044715
  %v1122 = vmul.f32 %v1118, 0.044715
  %v1123 = vmul.f32 %v1119, 0.044715
  %v1124 = vadd.f32 %v1103, %v1120
  %v1125 = vadd.f32 %v1105, %v1121
  %v1126 = vadd.f32 %v1108, %v1122
  %v1127 = vadd.f32 %v1110, %v1123
  %v1128 = vmul.f32 %v1124, 0.7978846
  %v1129 = vmul.f32 %v1125, 0.7978846
  %v1130 = vmul.f32 %v1126, 0.7978846
  %v1131 = vmul.f32 %v1127, 0.7978846
  %v1132 = vtanh.pop %v1128
  %v1133 = vtanh.pop %v1129
  %v1134 = vtanh.pop %v1130
  %v1135 = vtanh.pop %v1131
  %v1136 = vadd.f32 %v1132, 1.0
  %v1137 = vadd.f32 %v1133, 1.0
  %v1138 = vadd.f32 %v1134, 1.0
  %v1139 = vadd.f32 %v1135, 1.0
  %v1140 = vmul.f32 %v1136, 0.5
  %v1141 = vmul.f32 %v1137, 0.5
  %v1142 = vmul.f32 %v1138, 0.5
  %v1143 = vmul.f32 %v1139, 0.5
  %v1144 = vmul.f32 %v1103, %v1140
  %v1145 = vmul.f32 %v1105, %v1141
  %v1146 = vmul.f32 %v1108, %v1142
  %v1147 = vmul.f32 %v1110, %v1143
  %v1148 = vpack.c.bf16 %v1145, %v1144
  %v1149 = vpack.c.bf16 %v1147, %v1146
  %v1150 = vld [vmem:[%s8] sm:$0xf]
  %v1151 = vld [vmem:[%s8 + $0x4] sm:$0xf]
  %v1152 = vld [vmem:[%s8 + $0x8] sm:$0xf]
  %v1153 = vld [vmem:[%s8 + $0xc] sm:$0xf]
  %v1154 = vld [vmem:[%s8 + $0x10] sm:$0xf]
  %v1155 = vld [vmem:[%s8 + $0x14] sm:$0xf]
  %v1156 = vld [vmem:[%s8 + $0x18] sm:$0xf]
  %v1157 = vld [vmem:[%s8 + $0x1c] sm:$0xf]
  %v1158 = vld [vmem:[%s8 + $0x20] sm:$0xf]
  %v1159 = vld [vmem:[%s8 + $0x24] sm:$0xf]
  %v1160 = vld [vmem:[%s8 + $0x28] sm:$0xf]
  %v1161 = vld [vmem:[%s8 + $0x2c] sm:$0xf]
  %v1162 = vld [vmem:[%s8 + $0x30] sm:$0xf]
  %v1163 = vld [vmem:[%s8 + $0x34] sm:$0xf]
  %v1164 = vld [vmem:[%s8 + $0x38] sm:$0xf]
  %v1165 = vld [vmem:[%s8 + $0x3c] sm:$0xf]
  %v1166 = vperm.slane %v231, 7
  %v1183 = vunpack.c.l.b16 %v1150
  %v1184 = vunpack.c.l.b16 %v1151
  %v1185 = vunpack.c.l.b16 %v1152
  %v1186 = vunpack.c.l.b16 %v1153
  %v1187 = vunpack.c.l.b16 %v1154
  %v1188 = vunpack.c.l.b16 %v1155
  %v1189 = vunpack.c.l.b16 %v1156
  %v1190 = vunpack.c.l.b16 %v1157
  %v1191 = vunpack.c.l.b16 %v1158
  %v1192 = vunpack.c.l.b16 %v1159
  %v1193 = vunpack.c.l.b16 %v1160
  %v1194 = vunpack.c.l.b16 %v1161
  %v1195 = vunpack.c.l.b16 %v1162
  %v1196 = vunpack.c.l.b16 %v1163
  %v1197 = vunpack.c.l.b16 %v1164
  %v1198 = vunpack.c.l.b16 %v1165
  %v1199 = vpack.c.b16 %v1184, %v1183
  %v1200 = vpack.c.b16 %v1186, %v1185
  %v1201 = vpack.c.b16 %v1188, %v1187
  %v1202 = vpack.c.b16 %v1190, %v1189
  %v1203 = vpack.c.b16 %v1192, %v1191
  %v1204 = vpack.c.b16 %v1194, %v1193
  %v1205 = vpack.c.b16 %v1196, %v1195
  %v1206 = vpack.c.b16 %v1198, %v1197
  %1215 = vmatpush.bf16.msra.mxu0 %v1206
  %1216 = vmatpush.bf16.msra.mxu0 %v1205
  %1217 = vmatpush.bf16.msra.mxu0 %v1204
  %1218 = vmatpush.bf16.msra.mxu0 %v1203
  %1219 = vmatpush.bf16.msra.mxu0 %v1202
  %1220 = vmatpush.bf16.msra.mxu0 %v1201
  %1221 = vmatpush.bf16.msra.mxu0 %v1200
  %1222 = vmatpush.bf16.msra.mxu0 %v1199
  %1223 = vmatmul.bf16.gmra.mxu0 %v1148
  %v1224 = vpop.f32.mrf.mxu0
  %v1225 = vadd.f32 %v1166, %v1224
  %v1226 = vpop.f32.mrf.mxu0
  %v1227 = vadd.f32 %v1166, %v1226
  %1228 = vmatmul.bf16.gmra.mxu0 %v1149
  %v1229 = vpop.f32.mrf.mxu0
  %v1230 = vadd.f32 %v1166, %v1229
  %v1231 = vpop.f32.mrf.mxu0
  %v1232 = vadd.f32 %v1166, %v1231
  %1233 = vdwg.mxu0
  %v1234 = vadd.f32 %v958, %v1225
  %v1235 = vadd.f32 %v959, %v1227
  %v1236 = vadd.f32 %v960, %v1230
  %v1237 = vadd.f32 %v961, %v1232
  %s1238 = scalar_lea.vmem %s4, 16
  %v1239 = vld [vmem:[%s1238] sm:$0xff]
  %v1240 = vsel %vm232, %v1234, 0.0
  %1241 = vadd.xlane.f32.xlu0 %v1240
  %v1242 = vpop.xlane.xlu0 %1241
  %v1243 = vsel %vm232, %v1235, 0.0
  %1244 = vadd.xlane.f32.xlu0 %v1243
  %v1245 = vpop.xlane.xlu0 %1244
  %v1246 = vsel %vm232, %v1236, 0.0
  %1247 = vadd.xlane.f32.xlu0 %v1246
  %v1248 = vpop.xlane.xlu0 %1247
  %v1249 = vsel %vm232, %v1237, 0.0
  %1250 = vadd.xlane.f32.xlu0 %v1249
  %v1251 = vpop.xlane.xlu0 %1250
  %v1252 = vmul.f32 %v1234, %v1234
  %v1253 = vmul.f32 %v1235, %v1235
  %v1254 = vmul.f32 %v1236, %v1236
  %v1255 = vmul.f32 %v1237, %v1237
  %v1256 = vsel %vm232, %v1252, 0.0
  %1257 = vadd.xlane.f32.xlu0 %v1256
  %v1258 = vpop.xlane.xlu0 %1257
  %v1259 = vsel %vm232, %v1253, 0.0
  %1260 = vadd.xlane.f32.xlu0 %v1259
  %v1261 = vpop.xlane.xlu0 %1260
  %v1262 = vsel %vm232, %v1254, 0.0
  %1263 = vadd.xlane.f32.xlu0 %v1262
  %v1264 = vpop.xlane.xlu0 %1263
  %v1265 = vsel %vm232, %v1255, 0.0
  %1266 = vadd.xlane.f32.xlu0 %v1265
  %v1267 = vpop.xlane.xlu0 %1266
  %v1268 = vmul.f32 %v1242, 0.03125
  %v1269 = vmul.f32 %v1245, 0.03125
  %v1270 = vmul.f32 %v1248, 0.03125
  %v1271 = vmul.f32 %v1251, 0.03125
  %v1272 = vmul.f32 %v1258, 0.03125
  %v1273 = vmul.f32 %v1261, 0.03125
  %v1274 = vmul.f32 %v1264, 0.03125
  %v1275 = vmul.f32 %v1267, 0.03125
  %v1276 = vmul.f32 %v1268, %v1268
  %v1277 = vmul.f32 %v1269, %v1269
  %v1278 = vmul.f32 %v1270, %v1270
  %v1279 = vmul.f32 %v1271, %v1271
  %v1280 = vsub.f32 %v1272, %v1276
  %v1281 = vsub.f32 %v1273, %v1277
  %v1282 = vsub.f32 %v1274, %v1278
  %v1283 = vsub.f32 %v1275, %v1279
  %v1284 = vsub.f32 %v1234, %v1268
  %v1285 = vsub.f32 %v1235, %v1269
  %v1286 = vsub.f32 %v1236, %v1270
  %v1287 = vsub.f32 %v1237, %v1271
  %v1288 = vadd.f32 %v1280, 1e-06
  %v1289 = vadd.f32 %v1281, 1e-06
  %v1290 = vadd.f32 %v1282, 1e-06
  %v1291 = vadd.f32 %v1283, 1e-06
  %v1292 = vrsqrt.pop %v1288
  %v1293 = vmul.f32 %v1292, %v1288
  %v1294 = vmul.f32 %v1293, %v1292
  %v1295 = vmul.f32 0.5, %v1294
  %v1296 = vsub.f32 1.5, %v1295
  %v1297 = vmul.f32 %v1292, %v1296
  %vm1298 = vweird.f32 %v1288
  %vm1299 = vweird.f32 %v1292
  %vm1300 = vmor %vm1298, %vm1299
  %v1301 = vsel %vm1300, %v1292, %v1297
  %v1302 = vrsqrt.pop %v1289
  %v1303 = vmul.f32 %v1302, %v1289
  %v1304 = vmul.f32 %v1303, %v1302
  %v1305 = vmul.f32 0.5, %v1304
  %v1306 = vsub.f32 1.5, %v1305
  %v1307 = vmul.f32 %v1302, %v1306
  %vm1308 = vweird.f32 %v1289
  %vm1309 = vweird.f32 %v1302
  %vm1310 = vmor %vm1308, %vm1309
  %v1311 = vsel %vm1310, %v1302, %v1307
  %v1312 = vrsqrt.pop %v1290
  %v1313 = vmul.f32 %v1312, %v1290
  %v1314 = vmul.f32 %v1313, %v1312
  %v1315 = vmul.f32 0.5, %v1314
  %v1316 = vsub.f32 1.5, %v1315
  %v1317 = vmul.f32 %v1312, %v1316
  %vm1318 = vweird.f32 %v1290
  %vm1319 = vweird.f32 %v1312
  %vm1320 = vmor %vm1318, %vm1319
  %v1321 = vsel %vm1320, %v1312, %v1317
  %v1322 = vrsqrt.pop %v1291
  %v1323 = vmul.f32 %v1322, %v1291
  %v1324 = vmul.f32 %v1323, %v1322
  %v1325 = vmul.f32 0.5, %v1324
  %v1326 = vsub.f32 1.5, %v1325
  %v1327 = vmul.f32 %v1322, %v1326
  %vm1328 = vweird.f32 %v1291
  %vm1329 = vweird.f32 %v1322
  %vm1330 = vmor %vm1328, %vm1329
  %v1331 = vsel %vm1330, %v1322, %v1327
  %v1332 = vmul.f32 %v1284, %v1301
  %v1333 = vmul.f32 %v1285, %v1311
  %v1334 = vmul.f32 %v1286, %v1321
  %v1335 = vmul.f32 %v1287, %v1331
  %v1336 = vperm.slane %v1239, 0
  %v1337 = vmul.f32 %v1332, %v1336
  %v1338 = vmul.f32 %v1333, %v1336
  %v1339 = vmul.f32 %v1334, %v1336
  %v1340 = vmul.f32 %v1335, %v1336
  %v1341 = vperm.slane %v1239, 1
  %v1342 = vadd.f32 %v1337, %v1341
  %v1343 = vadd.f32 %v1338, %v1341
  %v1344 = vadd.f32 %v1339, %v1341
  %v1345 = vadd.f32 %v1340, %v1341
  %v1346 = vpack.c.bf16 %v1343, %v1342
  %v1347 = vpack.c.bf16 %v1345, %v1344
  %s1348 = scalar_lea.vmem %s5, 16
  %v1349 = vld [vmem:[%s1348] sm:$0xf]
  %v1350 = vld [vmem:[%s1348 + $0x4] sm:$0xf]
  %v1351 = vld [vmem:[%s1348 + $0x8] sm:$0xf]
  %v1352 = vld [vmem:[%s1348 + $0xc] sm:$0xf]
  %v1353 = vperm.slane %v1239, 2
  %v1358 = vunpack.c.l.b16 %v1349
  %v1359 = vunpack.c.l.b16 %v1350
  %v1360 = vunpack.c.l.b16 %v1351
  %v1361 = vunpack.c.l.b16 %v1352
  %v1362 = vpack.c.b16 %v1359, %v1358
  %v1363 = vpack.c.b16 %v1361, %v1360
  %v1367 = vsel %vm232, %v1346, 0
  %v1370 = vsel %vm232, %v1347, 0
  %1372 = vmatpush.bf16.msra.mxu0 0
  %1373 = vmatpush.bf16.msra.mxu0 0
  %1374 = vmatpush.bf16.msra.mxu0 0
  %1375 = vmatpush.bf16.msra.mxu0 0
  %1376 = vmatpush.bf16.msra.mxu0 0
  %1377 = vmatpush.bf16.msra.mxu0 0
  %1378 = vmatpush.bf16.msra.mxu0 %v1363
  %1379 = vmatpush.bf16.msra.mxu0 %v1362
  %1380 = vmatmul.bf16.gmra.mxu0 %v1367
  %v1381 = vpop.f32.mrf.mxu0
  %v1382 = vadd.f32 %v1353, %v1381
  %v1383 = vpop.f32.mrf.mxu0
  %v1384 = vadd.f32 %v1353, %v1383
  %1385 = vmatmul.bf16.gmra.mxu0 %v1370
  %v1386 = vpop.f32.mrf.mxu0
  %v1387 = vadd.f32 %v1353, %v1386
  %v1388 = vpop.f32.mrf.mxu0
  %v1389 = vadd.f32 %v1353, %v1388
  %1390 = vdwg.mxu0
  %v1391 = vpack.c.bf16 %v1384, %v1382
  %v1392 = vpack.c.bf16 %v1389, %v1387
  %1395 = vrot.lane.b32.xlu0 %v1391, 96
  %v1396 = vpop.permute.xlu0 %1395
  %1397 = vrot.lane.b32.xlu0 %v1392, 96
  %v1398 = vpop.permute.xlu0 %1397
  %v1400 = vsel %vm391, %v1391, 0
  %v1403 = vsel %vm391, %v1392, 0
  %v1406 = vsel %vm391, %v1396, 0
  %v1409 = vsel %vm391, %v1398, 0
  %1411 = vmatpush.bf16.xpose.msra.mxu0 0
  %1412 = vmatpush.bf16.xpose.msra.mxu0 0
  %1413 = vmatpush.bf16.xpose.msra.mxu0 0
  %1414 = vmatpush.bf16.xpose.msra.mxu0 0
  %1415 = vmatpush.bf16.xpose.msra.mxu0 0
  %1416 = vmatpush.bf16.xpose.msra.mxu0 0
  %1417 = vmatpush.bf16.xpose.msra.mxu0 %v1409
  %1418 = vmatpush.bf16.xpose.msra.mxu0 %v1406
  %1419 = vmatmul.bf16.gmra.mxu0 %v1400
  %v1420 = vpop.f32.mrf.mxu0
  %v1421 = vadd.f32 %v227, %v1420
  %v1422 = vpop.f32.mrf.mxu0
  %v1423 = vadd.f32 %v228, %v1422
  %1424 = vmatmul.bf16.gmra.mxu0 %v1403
  %v1425 = vpop.f32.mrf.mxu0
  %v1426 = vadd.f32 %v229, %v1425
  %v1427 = vpop.f32.mrf.mxu0
  %v1428 = vadd.f32 %v230, %v1427
  %1429 = vdwg.mxu0
  %v1430 = vsel %vm232, %v1421, -inf
  %1431 = vmax.xlane.f32.xlu0 %v1430
  %v1432 = vpop.xlane.xlu0 %1431
  %v1433 = vsel %vm232, %v1423, -inf
  %1434 = vmax.xlane.f32.xlu0 %v1433
  %v1435 = vpop.xlane.xlu0 %1434
  %v1436 = vsel %vm232, %v1426, -inf
  %1437 = vmax.xlane.f32.xlu0 %v1436
  %v1438 = vpop.xlane.xlu0 %1437
  %v1439 = vsel %vm232, %v1428, -inf
  %1440 = vmax.xlane.f32.xlu0 %v1439
  %v1441 = vpop.xlane.xlu0 %1440
  %v1442 = vsub.f32 %v1421, %v1432
  %v1443 = vsub.f32 %v1423, %v1435
  %v1444 = vsub.f32 %v1426, %v1438
  %v1445 = vsub.f32 %v1428, %v1441
  %v1446 = vmul.f32 %v1442, 1.442695
  %v1447 = vpow.pop %v1446
  %v1448 = vmul.f32 %v1443, 1.442695
  %v1449 = vpow.pop %v1448
  %v1450 = vmul.f32 %v1444, 1.442695
  %v1451 = vpow.pop %v1450
  %v1452 = vmul.f32 %v1445, 1.442695
  %v1453 = vpow.pop %v1452
  %v1454 = vsel %vm232, %v1447, 0.0
  %1455 = vadd.xlane.f32.xlu0 %v1454
  %v1456 = vpop.xlane.xlu0 %1455
  %v1457 = vsel %vm232, %v1449, 0.0
  %1458 = vadd.xlane.f32.xlu0 %v1457
  %v1459 = vpop.xlane.xlu0 %1458
  %v1460 = vsel %vm232, %v1451, 0.0
  %1461 = vadd.xlane.f32.xlu0 %v1460
  %v1462 = vpop.xlane.xlu0 %1461
  %v1463 = vsel %vm232, %v1453, 0.0
  %1464 = vadd.xlane.f32.xlu0 %v1463
  %v1465 = vpop.xlane.xlu0 %1464
  %v1466 = vpack.c.bf16 %v1449, %v1447
  %v1467 = vpack.c.bf16 %v1453, %v1451
  %1468 = vrot.lane.b32.xlu0 %v1391, 64
  %v1469 = vpop.permute.xlu0 %1468
  %1470 = vrot.lane.b32.xlu0 %v1392, 64
  %v1471 = vpop.permute.xlu0 %1470
  %v1475 = vsel %vm232, %v1466, 0
  %v1478 = vsel %vm232, %v1467, 0
  %1480 = vmatpush.bf16.msra.mxu0 0
  %1481 = vmatpush.bf16.msra.mxu0 0
  %1482 = vmatpush.bf16.msra.mxu0 0
  %1483 = vmatpush.bf16.msra.mxu0 0
  %1484 = vmatpush.bf16.msra.mxu0 0
  %1485 = vmatpush.bf16.msra.mxu0 0
  %1486 = vmatpush.bf16.msra.mxu0 %v1471
  %1487 = vmatpush.bf16.msra.mxu0 %v1469
  %1488 = vmatmul.bf16.gmra.mxu0 %v1475
  %v1489 = vpop.f32.mrf.mxu0
  %v1490 = vadd.f32 0.0, %v1489
  %v1491 = vpop.f32.mrf.mxu0
  %v1492 = vadd.f32 0.0, %v1491
  %1493 = vmatmul.bf16.gmra.mxu0 %v1478
  %v1494 = vpop.f32.mrf.mxu0
  %v1495 = vadd.f32 0.0, %v1494
  %v1496 = vpop.f32.mrf.mxu0
  %v1497 = vadd.f32 0.0, %v1496
  %1498 = vdwg.mxu0
  %v1499 = vrcp.pop %v1456
  %v1500 = vrcp.pop %v1459
  %v1501 = vrcp.pop %v1462
  %v1502 = vrcp.pop %v1465
  %v1503 = vmul.f32 %v1490, %v1499
  %v1504 = vmul.f32 %v1492, %v1500
  %v1505 = vmul.f32 %v1495, %v1501
  %v1506 = vmul.f32 %v1497, %v1502
  %1507 = vrot.lane.b32.xlu0 %v1391, 120
  %v1508 = vpop.permute.xlu0 %1507
  %1509 = vrot.lane.b32.xlu0 %v1392, 120
  %v1510 = vpop.permute.xlu0 %1509
  %1511 = vrot.lane.b32.xlu0 %v1391, 88
  %v1512 = vpop.permute.xlu0 %1511
  %1513 = vrot.lane.b32.xlu0 %v1392, 88
  %v1514 = vpop.permute.xlu0 %1513
  %v1516 = vsel %vm391, %v1508, 0
  %v1519 = vsel %vm391, %v1510, 0
  %v1522 = vsel %vm391, %v1512, 0
  %v1525 = vsel %vm391, %v1514, 0
  %1527 = vmatpush.bf16.xpose.msra.mxu0 0
  %1528 = vmatpush.bf16.xpose.msra.mxu0 0
  %1529 = vmatpush.bf16.xpose.msra.mxu0 0
  %1530 = vmatpush.bf16.xpose.msra.mxu0 0
  %1531 = vmatpush.bf16.xpose.msra.mxu0 0
  %1532 = vmatpush.bf16.xpose.msra.mxu0 0
  %1533 = vmatpush.bf16.xpose.msra.mxu0 %v1525
  %1534 = vmatpush.bf16.xpose.msra.mxu0 %v1522
  %1535 = vmatmul.bf16.gmra.mxu0 %v1516
  %v1536 = vpop.f32.mrf.mxu0
  %v1537 = vadd.f32 %v227, %v1536
  %v1538 = vpop.f32.mrf.mxu0
  %v1539 = vadd.f32 %v228, %v1538
  %1540 = vmatmul.bf16.gmra.mxu0 %v1519
  %v1541 = vpop.f32.mrf.mxu0
  %v1542 = vadd.f32 %v229, %v1541
  %v1543 = vpop.f32.mrf.mxu0
  %v1544 = vadd.f32 %v230, %v1543
  %1545 = vdwg.mxu0
  %v1546 = vsel %vm232, %v1537, -inf
  %1547 = vmax.xlane.f32.xlu0 %v1546
  %v1548 = vpop.xlane.xlu0 %1547
  %v1549 = vsel %vm232, %v1539, -inf
  %1550 = vmax.xlane.f32.xlu0 %v1549
  %v1551 = vpop.xlane.xlu0 %1550
  %v1552 = vsel %vm232, %v1542, -inf
  %1553 = vmax.xlane.f32.xlu0 %v1552
  %v1554 = vpop.xlane.xlu0 %1553
  %v1555 = vsel %vm232, %v1544, -inf
  %1556 = vmax.xlane.f32.xlu0 %v1555
  %v1557 = vpop.xlane.xlu0 %1556
  %v1558 = vsub.f32 %v1537, %v1548
  %v1559 = vsub.f32 %v1539, %v1551
  %v1560 = vsub.f32 %v1542, %v1554
  %v1561 = vsub.f32 %v1544, %v1557
  %v1562 = vmul.f32 %v1558, 1.442695
  %v1563 = vpow.pop %v1562
  %v1564 = vmul.f32 %v1559, 1.442695
  %v1565 = vpow.pop %v1564
  %v1566 = vmul.f32 %v1560, 1.442695
  %v1567 = vpow.pop %v1566
  %v1568 = vmul.f32 %v1561, 1.442695
  %v1569 = vpow.pop %v1568
  %v1570 = vsel %vm232, %v1563, 0.0
  %1571 = vadd.xlane.f32.xlu0 %v1570
  %v1572 = vpop.xlane.xlu0 %1571
  %v1573 = vsel %vm232, %v1565, 0.0
  %1574 = vadd.xlane.f32.xlu0 %v1573
  %v1575 = vpop.xlane.xlu0 %1574
  %v1576 = vsel %vm232, %v1567, 0.0
  %1577 = vadd.xlane.f32.xlu0 %v1576
  %v1578 = vpop.xlane.xlu0 %1577
  %v1579 = vsel %vm232, %v1569, 0.0
  %1580 = vadd.xlane.f32.xlu0 %v1579
  %v1581 = vpop.xlane.xlu0 %1580
  %v1582 = vpack.c.bf16 %v1565, %v1563
  %v1583 = vpack.c.bf16 %v1569, %v1567
  %1584 = vrot.lane.b32.xlu0 %v1391, 56
  %v1585 = vpop.permute.xlu0 %1584
  %1586 = vrot.lane.b32.xlu0 %v1392, 56
  %v1587 = vpop.permute.xlu0 %1586
  %v1591 = vsel %vm232, %v1582, 0
  %v1594 = vsel %vm232, %v1583, 0
  %1596 = vmatpush.bf16.msra.mxu0 0
  %1597 = vmatpush.bf16.msra.mxu0 0
  %1598 = vmatpush.bf16.msra.mxu0 0
  %1599 = vmatpush.bf16.msra.mxu0 0
  %1600 = vmatpush.bf16.msra.mxu0 0
  %1601 = vmatpush.bf16.msra.mxu0 0
  %1602 = vmatpush.bf16.msra.mxu0 %v1587
  %1603 = vmatpush.bf16.msra.mxu0 %v1585
  %1604 = vmatmul.bf16.gmra.mxu0 %v1591
  %v1605 = vpop.f32.mrf.mxu0
  %v1606 = vadd.f32 0.0, %v1605
  %v1607 = vpop.f32.mrf.mxu0
  %v1608 = vadd.f32 0.0, %v1607
  %1609 = vmatmul.bf16.gmra.mxu0 %v1594
  %v1610 = vpop.f32.mrf.mxu0
  %v1611 = vadd.f32 0.0, %v1610
  %v1612 = vpop.f32.mrf.mxu0
  %v1613 = vadd.f32 0.0, %v1612
  %1614 = vdwg.mxu0
  %v1615 = vrcp.pop %v1572
  %v1616 = vrcp.pop %v1575
  %v1617 = vrcp.pop %v1578
  %v1618 = vrcp.pop %v1581
  %v1619 = vmul.f32 %v1606, %v1615
  %v1620 = vmul.f32 %v1608, %v1616
  %v1621 = vmul.f32 %v1611, %v1617
  %v1622 = vmul.f32 %v1613, %v1618
  %1623 = vrot.lane.b32.xlu0 %v1391, 112
  %v1624 = vpop.permute.xlu0 %1623
  %1625 = vrot.lane.b32.xlu0 %v1392, 112
  %v1626 = vpop.permute.xlu0 %1625
  %1627 = vrot.lane.b32.xlu0 %v1391, 80
  %v1628 = vpop.permute.xlu0 %1627
  %1629 = vrot.lane.b32.xlu0 %v1392, 80
  %v1630 = vpop.permute.xlu0 %1629
  %v1632 = vsel %vm391, %v1624, 0
  %v1635 = vsel %vm391, %v1626, 0
  %v1638 = vsel %vm391, %v1628, 0
  %v1641 = vsel %vm391, %v1630, 0
  %1643 = vmatpush.bf16.xpose.msra.mxu0 0
  %1644 = vmatpush.bf16.xpose.msra.mxu0 0
  %1645 = vmatpush.bf16.xpose.msra.mxu0 0
  %1646 = vmatpush.bf16.xpose.msra.mxu0 0
  %1647 = vmatpush.bf16.xpose.msra.mxu0 0
  %1648 = vmatpush.bf16.xpose.msra.mxu0 0
  %1649 = vmatpush.bf16.xpose.msra.mxu0 %v1641
  %1650 = vmatpush.bf16.xpose.msra.mxu0 %v1638
  %1651 = vmatmul.bf16.gmra.mxu0 %v1632
  %v1652 = vpop.f32.mrf.mxu0
  %v1653 = vadd.f32 %v227, %v1652
  %v1654 = vpop.f32.mrf.mxu0
  %v1655 = vadd.f32 %v228, %v1654
  %1656 = vmatmul.bf16.gmra.mxu0 %v1635
  %v1657 = vpop.f32.mrf.mxu0
  %v1658 = vadd.f32 %v229, %v1657
  %v1659 = vpop.f32.mrf.mxu0
  %v1660 = vadd.f32 %v230, %v1659
  %1661 = vdwg.mxu0
  %v1662 = vsel %vm232, %v1653, -inf
  %1663 = vmax.xlane.f32.xlu0 %v1662
  %v1664 = vpop.xlane.xlu0 %1663
  %v1665 = vsel %vm232, %v1655, -inf
  %1666 = vmax.xlane.f32.xlu0 %v1665
  %v1667 = vpop.xlane.xlu0 %1666
  %v1668 = vsel %vm232, %v1658, -inf
  %1669 = vmax.xlane.f32.xlu0 %v1668
  %v1670 = vpop.xlane.xlu0 %1669
  %v1671 = vsel %vm232, %v1660, -inf
  %1672 = vmax.xlane.f32.xlu0 %v1671
  %v1673 = vpop.xlane.xlu0 %1672
  %v1674 = vsub.f32 %v1653, %v1664
  %v1675 = vsub.f32 %v1655, %v1667
  %v1676 = vsub.f32 %v1658, %v1670
  %v1677 = vsub.f32 %v1660, %v1673
  %v1678 = vmul.f32 %v1674, 1.442695
  %v1679 = vpow.pop %v1678
  %v1680 = vmul.f32 %v1675, 1.442695
  %v1681 = vpow.pop %v1680
  %v1682 = vmul.f32 %v1676, 1.442695
  %v1683 = vpow.pop %v1682
  %v1684 = vmul.f32 %v1677, 1.442695
  %v1685 = vpow.pop %v1684
  %v1686 = vsel %vm232, %v1679, 0.0
  %1687 = vadd.xlane.f32.xlu0 %v1686
  %v1688 = vpop.xlane.xlu0 %1687
  %v1689 = vsel %vm232, %v1681, 0.0
  %1690 = vadd.xlane.f32.xlu0 %v1689
  %v1691 = vpop.xlane.xlu0 %1690
  %v1692 = vsel %vm232, %v1683, 0.0
  %1693 = vadd.xlane.f32.xlu0 %v1692
  %v1694 = vpop.xlane.xlu0 %1693
  %v1695 = vsel %vm232, %v1685, 0.0
  %1696 = vadd.xlane.f32.xlu0 %v1695
  %v1697 = vpop.xlane.xlu0 %1696
  %v1698 = vpack.c.bf16 %v1681, %v1679
  %v1699 = vpack.c.bf16 %v1685, %v1683
  %1700 = vrot.lane.b32.xlu0 %v1391, 48
  %v1701 = vpop.permute.xlu0 %1700
  %1702 = vrot.lane.b32.xlu0 %v1392, 48
  %v1703 = vpop.permute.xlu0 %1702
  %v1707 = vsel %vm232, %v1698, 0
  %v1710 = vsel %vm232, %v1699, 0
  %1712 = vmatpush.bf16.msra.mxu0 0
  %1713 = vmatpush.bf16.msra.mxu0 0
  %1714 = vmatpush.bf16.msra.mxu0 0
  %1715 = vmatpush.bf16.msra.mxu0 0
  %1716 = vmatpush.bf16.msra.mxu0 0
  %1717 = vmatpush.bf16.msra.mxu0 0
  %1718 = vmatpush.bf16.msra.mxu0 %v1703
  %1719 = vmatpush.bf16.msra.mxu0 %v1701
  %1720 = vmatmul.bf16.gmra.mxu0 %v1707
  %v1721 = vpop.f32.mrf.mxu0
  %v1722 = vadd.f32 0.0, %v1721
  %v1723 = vpop.f32.mrf.mxu0
  %v1724 = vadd.f32 0.0, %v1723
  %1725 = vmatmul.bf16.gmra.mxu0 %v1710
  %v1726 = vpop.f32.mrf.mxu0
  %v1727 = vadd.f32 0.0, %v1726
  %v1728 = vpop.f32.mrf.mxu0
  %v1729 = vadd.f32 0.0, %v1728
  %1730 = vdwg.mxu0
  %v1731 = vrcp.pop %v1688
  %v1732 = vrcp.pop %v1691
  %v1733 = vrcp.pop %v1694
  %v1734 = vrcp.pop %v1697
  %v1735 = vmul.f32 %v1722, %v1731
  %v1736 = vmul.f32 %v1724, %v1732
  %v1737 = vmul.f32 %v1727, %v1733
  %v1738 = vmul.f32 %v1729, %v1734
  %1739 = vrot.lane.b32.xlu0 %v1391, 104
  %v1740 = vpop.permute.xlu0 %1739
  %1741 = vrot.lane.b32.xlu0 %v1392, 104
  %v1742 = vpop.permute.xlu0 %1741
  %1743 = vrot.lane.b32.xlu0 %v1391, 72
  %v1744 = vpop.permute.xlu0 %1743
  %1745 = vrot.lane.b32.xlu0 %v1392, 72
  %v1746 = vpop.permute.xlu0 %1745
  %v1748 = vsel %vm391, %v1740, 0
  %v1751 = vsel %vm391, %v1742, 0
  %v1754 = vsel %vm391, %v1744, 0
  %v1757 = vsel %vm391, %v1746, 0
  %1759 = vmatpush.bf16.xpose.msra.mxu0 0
  %1760 = vmatpush.bf16.xpose.msra.mxu0 0
  %1761 = vmatpush.bf16.xpose.msra.mxu0 0
  %1762 = vmatpush.bf16.xpose.msra.mxu0 0
  %1763 = vmatpush.bf16.xpose.msra.mxu0 0
  %1764 = vmatpush.bf16.xpose.msra.mxu0 0
  %1765 = vmatpush.bf16.xpose.msra.mxu0 %v1757
  %1766 = vmatpush.bf16.xpose.msra.mxu0 %v1754
  %1767 = vmatmul.bf16.gmra.mxu0 %v1748
  %v1768 = vpop.f32.mrf.mxu0
  %v1769 = vadd.f32 %v227, %v1768
  %v1770 = vpop.f32.mrf.mxu0
  %v1771 = vadd.f32 %v228, %v1770
  %1772 = vmatmul.bf16.gmra.mxu0 %v1751
  %v1773 = vpop.f32.mrf.mxu0
  %v1774 = vadd.f32 %v229, %v1773
  %v1775 = vpop.f32.mrf.mxu0
  %v1776 = vadd.f32 %v230, %v1775
  %1777 = vdwg.mxu0
  %v1778 = vsel %vm232, %v1769, -inf
  %1779 = vmax.xlane.f32.xlu0 %v1778
  %v1780 = vpop.xlane.xlu0 %1779
  %v1781 = vsel %vm232, %v1771, -inf
  %1782 = vmax.xlane.f32.xlu0 %v1781
  %v1783 = vpop.xlane.xlu0 %1782
  %v1784 = vsel %vm232, %v1774, -inf
  %1785 = vmax.xlane.f32.xlu0 %v1784
  %v1786 = vpop.xlane.xlu0 %1785
  %v1787 = vsel %vm232, %v1776, -inf
  %1788 = vmax.xlane.f32.xlu0 %v1787
  %v1789 = vpop.xlane.xlu0 %1788
  %v1790 = vsub.f32 %v1769, %v1780
  %v1791 = vsub.f32 %v1771, %v1783
  %v1792 = vsub.f32 %v1774, %v1786
  %v1793 = vsub.f32 %v1776, %v1789
  %v1794 = vmul.f32 %v1790, 1.442695
  %v1795 = vpow.pop %v1794
  %v1796 = vmul.f32 %v1791, 1.442695
  %v1797 = vpow.pop %v1796
  %v1798 = vmul.f32 %v1792, 1.442695
  %v1799 = vpow.pop %v1798
  %v1800 = vmul.f32 %v1793, 1.442695
  %v1801 = vpow.pop %v1800
  %v1802 = vsel %vm232, %v1795, 0.0
  %1803 = vadd.xlane.f32.xlu0 %v1802
  %v1804 = vpop.xlane.xlu0 %1803
  %v1805 = vsel %vm232, %v1797, 0.0
  %1806 = vadd.xlane.f32.xlu0 %v1805
  %v1807 = vpop.xlane.xlu0 %1806
  %v1808 = vsel %vm232, %v1799, 0.0
  %1809 = vadd.xlane.f32.xlu0 %v1808
  %v1810 = vpop.xlane.xlu0 %1809
  %v1811 = vsel %vm232, %v1801, 0.0
  %1812 = vadd.xlane.f32.xlu0 %v1811
  %v1813 = vpop.xlane.xlu0 %1812
  %v1814 = vpack.c.bf16 %v1797, %v1795
  %v1815 = vpack.c.bf16 %v1801, %v1799
  %1816 = vrot.lane.b32.xlu0 %v1391, 40
  %v1817 = vpop.permute.xlu0 %1816
  %1818 = vrot.lane.b32.xlu0 %v1392, 40
  %v1819 = vpop.permute.xlu0 %1818
  %v1823 = vsel %vm232, %v1814, 0
  %v1826 = vsel %vm232, %v1815, 0
  %1828 = vmatpush.bf16.msra.mxu0 0
  %1829 = vmatpush.bf16.msra.mxu0 0
  %1830 = vmatpush.bf16.msra.mxu0 0
  %1831 = vmatpush.bf16.msra.mxu0 0
  %1832 = vmatpush.bf16.msra.mxu0 0
  %1833 = vmatpush.bf16.msra.mxu0 0
  %1834 = vmatpush.bf16.msra.mxu0 %v1819
  %1835 = vmatpush.bf16.msra.mxu0 %v1817
  %1836 = vmatmul.bf16.gmra.mxu0 %v1823
  %v1837 = vpop.f32.mrf.mxu0
  %v1838 = vadd.f32 0.0, %v1837
  %v1839 = vpop.f32.mrf.mxu0
  %v1840 = vadd.f32 0.0, %v1839
  %1841 = vmatmul.bf16.gmra.mxu0 %v1826
  %v1842 = vpop.f32.mrf.mxu0
  %v1843 = vadd.f32 0.0, %v1842
  %v1844 = vpop.f32.mrf.mxu0
  %v1845 = vadd.f32 0.0, %v1844
  %1846 = vdwg.mxu0
  %v1847 = vrcp.pop %v1804
  %v1848 = vrcp.pop %v1807
  %v1849 = vrcp.pop %v1810
  %v1850 = vrcp.pop %v1813
  %v1851 = vmul.f32 %v1838, %v1847
  %v1852 = vmul.f32 %v1840, %v1848
  %v1853 = vmul.f32 %v1843, %v1849
  %v1854 = vmul.f32 %v1845, %v1850
  %1859 = vrot.lane.b32.xlu0 %v1619, 8
  %v1860 = vpop.permute.xlu0 %1859
  %1861 = vrot.lane.b32.xlu0 %v1620, 8
  %v1862 = vpop.permute.xlu0 %1861
  %1863 = vrot.lane.b32.xlu0 %v1621, 8
  %v1864 = vpop.permute.xlu0 %1863
  %1865 = vrot.lane.b32.xlu0 %v1622, 8
  %v1866 = vpop.permute.xlu0 %1865
  %1875 = vrot.lane.b32.xlu0 %v1735, 16
  %v1876 = vpop.permute.xlu0 %1875
  %1877 = vrot.lane.b32.xlu0 %v1736, 16
  %v1878 = vpop.permute.xlu0 %1877
  %1879 = vrot.lane.b32.xlu0 %v1737, 16
  %v1880 = vpop.permute.xlu0 %1879
  %1881 = vrot.lane.b32.xlu0 %v1738, 16
  %v1882 = vpop.permute.xlu0 %1881
  %1891 = vrot.lane.b32.xlu0 %v1851, 24
  %v1892 = vpop.permute.xlu0 %1891
  %1893 = vrot.lane.b32.xlu0 %v1852, 24
  %v1894 = vpop.permute.xlu0 %1893
  %1895 = vrot.lane.b32.xlu0 %v1853, 24
  %v1896 = vpop.permute.xlu0 %1895
  %1897 = vrot.lane.b32.xlu0 %v1854, 24
  %v1898 = vpop.permute.xlu0 %1897
  %v1903 = vsel %vm391, %v1503, %v1860
  %v1904 = vsel %vm391, %v1504, %v1862
  %v1905 = vsel %vm391, %v1505, %v1864
  %v1906 = vsel %vm391, %v1506, %v1866
  %v1907 = vsel %vm900, %v1903, %v1876
  %v1908 = vsel %vm900, %v1904, %v1878
  %v1909 = vsel %vm900, %v1905, %v1880
  %v1910 = vsel %vm900, %v1906, %v1882
  %v1911 = vsel %vm905, %v1907, %v1892
  %v1912 = vsel %vm905, %v1908, %v1894
  %v1913 = vsel %vm905, %v1909, %v1896
  %v1914 = vsel %vm905, %v1910, %v1898
  %v1915 = vpack.c.bf16 %v1912, %v1911
  %v1916 = vpack.c.bf16 %v1914, %v1913
  %s1917 = scalar_lea.vmem %s6, 16
  %v1918 = vld [vmem:[%s1917] sm:$0xf]
  %v1919 = vld [vmem:[%s1917 + $0x4] sm:$0xf]
  %v1920 = vld [vmem:[%s1917 + $0x8] sm:$0xf]
  %v1921 = vld [vmem:[%s1917 + $0xc] sm:$0xf]
  %v1926 = vunpack.c.l.b16 %v1918
  %v1927 = vunpack.c.l.b16 %v1919
  %v1928 = vunpack.c.l.b16 %v1920
  %v1929 = vunpack.c.l.b16 %v1921
  %v1930 = vpack.c.b16 %v1927, %v1926
  %v1931 = vpack.c.b16 %v1929, %v1928
  %v1935 = vsel %vm232, %v1915, 0
  %v1938 = vsel %vm232, %v1916, 0
  %1940 = vmatpush.bf16.msra.mxu0 0
  %1941 = vmatpush.bf16.msra.mxu0 0
  %1942 = vmatpush.bf16.msra.mxu0 0
  %1943 = vmatpush.bf16.msra.mxu0 0
  %1944 = vmatpush.bf16.msra.mxu0 0
  %1945 = vmatpush.bf16.msra.mxu0 0
  %1946 = vmatpush.bf16.msra.mxu0 %v1931
  %1947 = vmatpush.bf16.msra.mxu0 %v1930
  %1948 = vmatmul.bf16.gmra.mxu0 %v1935
  %v1949 = vpop.f32.mrf.mxu0
  %v1950 = vadd.f32 0.0, %v1949
  %v1951 = vpop.f32.mrf.mxu0
  %v1952 = vadd.f32 0.0, %v1951
  %1953 = vmatmul.bf16.gmra.mxu0 %v1938
  %v1954 = vpop.f32.mrf.mxu0
  %v1955 = vadd.f32 0.0, %v1954
  %v1956 = vpop.f32.mrf.mxu0
  %v1957 = vadd.f32 0.0, %v1956
  %1958 = vdwg.mxu0
  %v1959 = vadd.f32 %v1234, %v1950
  %v1960 = vadd.f32 %v1235, %v1952
  %v1961 = vadd.f32 %v1236, %v1955
  %v1962 = vadd.f32 %v1237, %v1957
  %v1963 = vperm.slane %v1239, 3
  %v1964 = vadd.f32 %v1959, %v1963
  %v1965 = vadd.f32 %v1960, %v1963
  %v1966 = vadd.f32 %v1961, %v1963
  %v1967 = vadd.f32 %v1962, %v1963
  %v1968 = vsel %vm232, %v1964, 0.0
  %1969 = vadd.xlane.f32.xlu0 %v1968
  %v1970 = vpop.xlane.xlu0 %1969
  %v1971 = vsel %vm232, %v1965, 0.0
  %1972 = vadd.xlane.f32.xlu0 %v1971
  %v1973 = vpop.xlane.xlu0 %1972
  %v1974 = vsel %vm232, %v1966, 0.0
  %1975 = vadd.xlane.f32.xlu0 %v1974
  %v1976 = vpop.xlane.xlu0 %1975
  %v1977 = vsel %vm232, %v1967, 0.0
  %1978 = vadd.xlane.f32.xlu0 %v1977
  %v1979 = vpop.xlane.xlu0 %1978
  %v1980 = vmul.f32 %v1964, %v1964
  %v1981 = vmul.f32 %v1965, %v1965
  %v1982 = vmul.f32 %v1966, %v1966
  %v1983 = vmul.f32 %v1967, %v1967
  %v1984 = vsel %vm232, %v1980, 0.0
  %1985 = vadd.xlane.f32.xlu0 %v1984
  %v1986 = vpop.xlane.xlu0 %1985
  %v1987 = vsel %vm232, %v1981, 0.0
  %1988 = vadd.xlane.f32.xlu0 %v1987
  %v1989 = vpop.xlane.xlu0 %1988
  %v1990 = vsel %vm232, %v1982, 0.0
  %1991 = vadd.xlane.f32.xlu0 %v1990
  %v1992 = vpop.xlane.xlu0 %1991
  %v1993 = vsel %vm232, %v1983, 0.0
  %1994 = vadd.xlane.f32.xlu0 %v1993
  %v1995 = vpop.xlane.xlu0 %1994
  %v1996 = vmul.f32 %v1970, 0.03125
  %v1997 = vmul.f32 %v1973, 0.03125
  %v1998 = vmul.f32 %v1976, 0.03125
  %v1999 = vmul.f32 %v1979, 0.03125
  %v2000 = vmul.f32 %v1986, 0.03125
  %v2001 = vmul.f32 %v1989, 0.03125
  %v2002 = vmul.f32 %v1992, 0.03125
  %v2003 = vmul.f32 %v1995, 0.03125
  %v2004 = vmul.f32 %v1996, %v1996
  %v2005 = vmul.f32 %v1997, %v1997
  %v2006 = vmul.f32 %v1998, %v1998
  %v2007 = vmul.f32 %v1999, %v1999
  %v2008 = vsub.f32 %v2000, %v2004
  %v2009 = vsub.f32 %v2001, %v2005
  %v2010 = vsub.f32 %v2002, %v2006
  %v2011 = vsub.f32 %v2003, %v2007
  %v2012 = vsub.f32 %v1964, %v1996
  %v2013 = vsub.f32 %v1965, %v1997
  %v2014 = vsub.f32 %v1966, %v1998
  %v2015 = vsub.f32 %v1967, %v1999
  %v2016 = vadd.f32 %v2008, 1e-06
  %v2017 = vadd.f32 %v2009, 1e-06
  %v2018 = vadd.f32 %v2010, 1e-06
  %v2019 = vadd.f32 %v2011, 1e-06
  %v2020 = vrsqrt.pop %v2016
  %v2021 = vmul.f32 %v2020, %v2016
  %v2022 = vmul.f32 %v2021, %v2020
  %v2023 = vmul.f32 0.5, %v2022
  %v2024 = vsub.f32 1.5, %v2023
  %v2025 = vmul.f32 %v2020, %v2024
  %vm2026 = vweird.f32 %v2016
  %vm2027 = vweird.f32 %v2020
  %vm2028 = vmor %vm2026, %vm2027
  %v2029 = vsel %vm2028, %v2020, %v2025
  %v2030 = vrsqrt.pop %v2017
  %v2031 = vmul.f32 %v2030, %v2017
  %v2032 = vmul.f32 %v2031, %v2030
  %v2033 = vmul.f32 0.5, %v2032
  %v2034 = vsub.f32 1.5, %v2033
  %v2035 = vmul.f32 %v2030, %v2034
  %vm2036 = vweird.f32 %v2017
  %vm2037 = vweird.f32 %v2030
  %vm2038 = vmor %vm2036, %vm2037
  %v2039 = vsel %vm2038, %v2030, %v2035
  %v2040 = vrsqrt.pop %v2018
  %v2041 = vmul.f32 %v2040, %v2018
  %v2042 = vmul.f32 %v2041, %v2040
  %v2043 = vmul.f32 0.5, %v2042
  %v2044 = vsub.f32 1.5, %v2043
  %v2045 = vmul.f32 %v2040, %v2044
  %vm2046 = vweird.f32 %v2018
  %vm2047 = vweird.f32 %v2040
  %vm2048 = vmor %vm2046, %vm2047
  %v2049 = vsel %vm2048, %v2040, %v2045
  %v2050 = vrsqrt.pop %v2019
  %v2051 = vmul.f32 %v2050, %v2019
  %v2052 = vmul.f32 %v2051, %v2050
  %v2053 = vmul.f32 0.5, %v2052
  %v2054 = vsub.f32 1.5, %v2053
  %v2055 = vmul.f32 %v2050, %v2054
  %vm2056 = vweird.f32 %v2019
  %vm2057 = vweird.f32 %v2050
  %vm2058 = vmor %vm2056, %vm2057
  %v2059 = vsel %vm2058, %v2050, %v2055
  %v2060 = vmul.f32 %v2012, %v2029
  %v2061 = vmul.f32 %v2013, %v2039
  %v2062 = vmul.f32 %v2014, %v2049
  %v2063 = vmul.f32 %v2015, %v2059
  %v2064 = vperm.slane %v1239, 4
  %v2065 = vmul.f32 %v2060, %v2064
  %v2066 = vmul.f32 %v2061, %v2064
  %v2067 = vmul.f32 %v2062, %v2064
  %v2068 = vmul.f32 %v2063, %v2064
  %v2069 = vperm.slane %v1239, 5
  %v2070 = vadd.f32 %v2065, %v2069
  %v2071 = vadd.f32 %v2066, %v2069
  %v2072 = vadd.f32 %v2067, %v2069
  %v2073 = vadd.f32 %v2068, %v2069
  %v2074 = vpack.c.bf16 %v2071, %v2070
  %v2075 = vpack.c.bf16 %v2073, %v2072
  %s2076 = scalar_lea.vmem %s7, 16
  %v2077 = vld [vmem:[%s2076] sm:$0xf]
  %v2078 = vld [vmem:[%s2076 + $0x4] sm:$0xf]
  %v2079 = vld [vmem:[%s2076 + $0x8] sm:$0xf]
  %v2080 = vld [vmem:[%s2076 + $0xc] sm:$0xf]
  %v2081 = vperm.slane %v1239, 6
  %v2086 = vunpack.c.l.b16 %v2077
  %v2087 = vunpack.c.l.b16 %v2078
  %v2088 = vunpack.c.l.b16 %v2079
  %v2089 = vunpack.c.l.b16 %v2080
  %v2090 = vpack.c.b16 %v2087, %v2086
  %v2091 = vpack.c.b16 %v2089, %v2088
  %v2095 = vsel %vm232, %v2074, 0
  %v2098 = vsel %vm232, %v2075, 0
  %2100 = vmatpush.bf16.msra.mxu0 0
  %2101 = vmatpush.bf16.msra.mxu0 0
  %2102 = vmatpush.bf16.msra.mxu0 0
  %2103 = vmatpush.bf16.msra.mxu0 0
  %2104 = vmatpush.bf16.msra.mxu0 0
  %2105 = vmatpush.bf16.msra.mxu0 0
  %2106 = vmatpush.bf16.msra.mxu0 %v2091
  %2107 = vmatpush.bf16.msra.mxu0 %v2090
  %2108 = vmatmul.bf16.gmra.mxu0 %v2095
  %v2109 = vpop.f32.mrf.mxu0
  %v2110 = vadd.f32 %v2081, %v2109
  %v2111 = vpop.f32.mrf.mxu0
  %v2112 = vadd.f32 %v2081, %v2111
  %2113 = vmatmul.bf16.gmra.mxu0 %v2098
  %v2114 = vpop.f32.mrf.mxu0
  %v2115 = vadd.f32 %v2081, %v2114
  %v2116 = vpop.f32.mrf.mxu0
  %v2117 = vadd.f32 %v2081, %v2116
  %2118 = vdwg.mxu0
  %v2119 = vmul.f32 %v2110, %v2110
  %v2120 = vmul.f32 %v2112, %v2112
  %v2121 = vmul.f32 %v2115, %v2115
  %v2122 = vmul.f32 %v2117, %v2117
  %v2123 = vmul.f32 %v2110, %v2119
  %v2124 = vmul.f32 %v2112, %v2120
  %v2125 = vmul.f32 %v2115, %v2121
  %v2126 = vmul.f32 %v2117, %v2122
  %v2127 = vmul.f32 %v2123, 0.044715
  %v2128 = vmul.f32 %v2124, 0.044715
  %v2129 = vmul.f32 %v2125, 0.044715
  %v2130 = vmul.f32 %v2126, 0.044715
  %v2131 = vadd.f32 %v2110, %v2127
  %v2132 = vadd.f32 %v2112, %v2128
  %v2133 = vadd.f32 %v2115, %v2129
  %v2134 = vadd.f32 %v2117, %v2130
  %v2135 = vmul.f32 %v2131, 0.7978846
  %v2136 = vmul.f32 %v2132, 0.7978846
  %v2137 = vmul.f32 %v2133, 0.7978846
  %v2138 = vmul.f32 %v2134, 0.7978846
  %v2139 = vtanh.pop %v2135
  %v2140 = vtanh.pop %v2136
  %v2141 = vtanh.pop %v2137
  %v2142 = vtanh.pop %v2138
  %v2143 = vadd.f32 %v2139, 1.0
  %v2144 = vadd.f32 %v2140, 1.0
  %v2145 = vadd.f32 %v2141, 1.0
  %v2146 = vadd.f32 %v2142, 1.0
  %v2147 = vmul.f32 %v2143, 0.5
  %v2148 = vmul.f32 %v2144, 0.5
  %v2149 = vmul.f32 %v2145, 0.5
  %v2150 = vmul.f32 %v2146, 0.5
  %v2151 = vmul.f32 %v2110, %v2147
  %v2152 = vmul.f32 %v2112, %v2148
  %v2153 = vmul.f32 %v2115, %v2149
  %v2154 = vmul.f32 %v2117, %v2150
  %v2155 = vpack.c.bf16 %v2152, %v2151
  %v2156 = vpack.c.bf16 %v2154, %v2153
  %s2157 = scalar_lea.vmem %s8, 64
  %v2158 = vld [vmem:[%s2157] sm:$0xf]
  %v2159 = vld [vmem:[%s2157 + $0x4] sm:$0xf]
  %v2160 = vld [vmem:[%s2157 + $0x8] sm:$0xf]
  %v2161 = vld [vmem:[%s2157 + $0xc] sm:$0xf]
  %v2162 = vld [vmem:[%s2157 + $0x10] sm:$0xf]
  %v2163 = vld [vmem:[%s2157 + $0x14] sm:$0xf]
  %v2164 = vld [vmem:[%s2157 + $0x18] sm:$0xf]
  %v2165 = vld [vmem:[%s2157 + $0x1c] sm:$0xf]
  %v2166 = vld [vmem:[%s2157 + $0x20] sm:$0xf]
  %v2167 = vld [vmem:[%s2157 + $0x24] sm:$0xf]
  %v2168 = vld [vmem:[%s2157 + $0x28] sm:$0xf]
  %v2169 = vld [vmem:[%s2157 + $0x2c] sm:$0xf]
  %v2170 = vld [vmem:[%s2157 + $0x30] sm:$0xf]
  %v2171 = vld [vmem:[%s2157 + $0x34] sm:$0xf]
  %v2172 = vld [vmem:[%s2157 + $0x38] sm:$0xf]
  %v2173 = vld [vmem:[%s2157 + $0x3c] sm:$0xf]
  %v2174 = vperm.slane %v1239, 7
  %v2191 = vunpack.c.l.b16 %v2158
  %v2192 = vunpack.c.l.b16 %v2159
  %v2193 = vunpack.c.l.b16 %v2160
  %v2194 = vunpack.c.l.b16 %v2161
  %v2195 = vunpack.c.l.b16 %v2162
  %v2196 = vunpack.c.l.b16 %v2163
  %v2197 = vunpack.c.l.b16 %v2164
  %v2198 = vunpack.c.l.b16 %v2165
  %v2199 = vunpack.c.l.b16 %v2166
  %v2200 = vunpack.c.l.b16 %v2167
  %v2201 = vunpack.c.l.b16 %v2168
  %v2202 = vunpack.c.l.b16 %v2169
  %v2203 = vunpack.c.l.b16 %v2170
  %v2204 = vunpack.c.l.b16 %v2171
  %v2205 = vunpack.c.l.b16 %v2172
  %v2206 = vunpack.c.l.b16 %v2173
  %v2207 = vpack.c.b16 %v2192, %v2191
  %v2208 = vpack.c.b16 %v2194, %v2193
  %v2209 = vpack.c.b16 %v2196, %v2195
  %v2210 = vpack.c.b16 %v2198, %v2197
  %v2211 = vpack.c.b16 %v2200, %v2199
  %v2212 = vpack.c.b16 %v2202, %v2201
  %v2213 = vpack.c.b16 %v2204, %v2203
  %v2214 = vpack.c.b16 %v2206, %v2205
  %2223 = vmatpush.bf16.msra.mxu0 %v2214
  %2224 = vmatpush.bf16.msra.mxu0 %v2213
  %2225 = vmatpush.bf16.msra.mxu0 %v2212
  %2226 = vmatpush.bf16.msra.mxu0 %v2211
  %2227 = vmatpush.bf16.msra.mxu0 %v2210
  %2228 = vmatpush.bf16.msra.mxu0 %v2209
  %2229 = vmatpush.bf16.msra.mxu0 %v2208
  %2230 = vmatpush.bf16.msra.mxu0 %v2207
  %2231 = vmatmul.bf16.gmra.mxu0 %v2155
  %v2232 = vpop.f32.mrf.mxu0
  %v2233 = vadd.f32 %v2174, %v2232
  %v2234 = vpop.f32.mrf.mxu0
  %2235 = vmatmul.bf16.gmra.mxu0 %v2156
  %v2236 = vpop.f32.mrf.mxu0
  %v2237 = vadd.f32 %v2174, %v2236
  %v2238 = vpop.f32.mrf.mxu0
  %2239 = vdwg.mxu0
  %v2240 = vadd.f32 %v1964, %v2233
  %v2241 = vadd.f32 %v1966, %v2237
  %v2242 = vld [vmem:[%s4 + $0x8] sm:$0xff]
  %v2243 = vsel %vm232, %v2240, 0.0
  %2244 = vadd.xlane.f32.xlu0 %v2243
  %v2245 = vpop.xlane.xlu0 %2244
  %v2246 = vsel %vm232, %v2241, 0.0
  %2247 = vadd.xlane.f32.xlu0 %v2246
  %v2248 = vpop.xlane.xlu0 %2247
  %v2249 = vmul.f32 %v2240, %v2240
  %v2250 = vmul.f32 %v2241, %v2241
  %v2251 = vsel %vm232, %v2249, 0.0
  %2252 = vadd.xlane.f32.xlu0 %v2251
  %v2253 = vpop.xlane.xlu0 %2252
  %v2254 = vsel %vm232, %v2250, 0.0
  %2255 = vadd.xlane.f32.xlu0 %v2254
  %v2256 = vpop.xlane.xlu0 %2255
  %v2257 = vmul.f32 %v2245, 0.03125
  %v2258 = vmul.f32 %v2248, 0.03125
  %v2259 = vmul.f32 %v2253, 0.03125
  %v2260 = vmul.f32 %v2256, 0.03125
  %v2261 = vmul.f32 %v2257, %v2257
  %v2262 = vmul.f32 %v2258, %v2258
  %v2263 = vsub.f32 %v2259, %v2261
  %v2264 = vsub.f32 %v2260, %v2262
  %v2265 = vsub.f32 %v2240, %v2257
  %v2266 = vsub.f32 %v2241, %v2258
  %v2267 = vadd.f32 %v2263, 1e-06
  %v2268 = vadd.f32 %v2264, 1e-06
  %v2269 = vrsqrt.pop %v2267
  %v2270 = vmul.f32 %v2269, %v2267
  %v2271 = vmul.f32 %v2270, %v2269
  %v2272 = vmul.f32 0.5, %v2271
  %v2273 = vsub.f32 1.5, %v2272
  %v2274 = vmul.f32 %v2269, %v2273
  %vm2275 = vweird.f32 %v2267
  %vm2276 = vweird.f32 %v2269
  %vm2277 = vmor %vm2275, %vm2276
  %v2278 = vsel %vm2277, %v2269, %v2274
  %v2279 = vrsqrt.pop %v2268
  %v2280 = vmul.f32 %v2279, %v2268
  %v2281 = vmul.f32 %v2280, %v2279
  %v2282 = vmul.f32 0.5, %v2281
  %v2283 = vsub.f32 1.5, %v2282
  %v2284 = vmul.f32 %v2279, %v2283
  %vm2285 = vweird.f32 %v2268
  %vm2286 = vweird.f32 %v2279
  %vm2287 = vmor %vm2285, %vm2286
  %v2288 = vsel %vm2287, %v2279, %v2284
  %v2289 = vmul.f32 %v2265, %v2278
  %v2290 = vmul.f32 %v2266, %v2288
  %v2291 = vperm.slane %v2242, 0
  %v2292 = vmul.f32 %v2289, %v2291
  %v2293 = vmul.f32 %v2290, %v2291
  %v2294 = vperm.slane %v2242, 1
  %v2295 = vadd.f32 %v2292, %v2294
  %v2296 = vadd.f32 %v2293, %v2294
  %2297 = vst [vmem:[%s9] sm:$0xff] 0.0
  %v2298 = vsel %vm232, %v2295, 0.0
  %v2299 = vrot.slane %v2298, 4
  %v2300 = vadd.f32 %v2298, %v2299
  %v2301 = vrot.slane %v2300, 2
  %v2302 = vadd.f32 %v2300, %v2301
  %v2303 = vrot.slane %v2302, 1
  %v2304 = vadd.f32 %v2302, %v2303
  %v2305 = vmul.f32 %v2304, 0.125
  %v2306 = vsel %vm232, %v2305, 0.0
  %2307 = vst [vmem:[%s9] sm:$0x1] %v2306
  %v2308 = vsel %vm232, %v2296, 0.0
  %v2309 = vrot.slane %v2308, 4
  %v2310 = vadd.f32 %v2308, %v2309
  %v2311 = vrot.slane %v2310, 2
  %v2312 = vadd.f32 %v2310, %v2311
  %v2313 = vrot.slane %v2312, 1
  %v2314 = vadd.f32 %v2312, %v2313
  %v2315 = vmul.f32 %v2314, 0.125
  %v2316 = vsel %vm232, %v2315, 0.0
  %2317 = vst [vmem:[%s9 + $0x1] sm:$0x1] %v2316
  // Predicated region
  $region38: #{prithvi_vit_forward.1} parent=0 // pred_check
    _
  $region39: #{prithvi_vit_forward.1} parent=0 // pred_check_branch
    %2319 = sbr.rel (0) target = $region41
  $region40: #{prithvi_vit_forward.1} parent=0 // pred_region
    _
  $region41: #{prithvi_vit_forward.1} parent=0 // pred_fallthru
    _
  // Predicated region
  $region42: #{prithvi_vit_forward.1} parent=0 // pred_check
    _
  $region43: #{prithvi_vit_forward.1} parent=0 // pred_check_branch
    %2321 = sbr.rel (0) target = $region45
  $region44: #{prithvi_vit_forward.1} parent=0 // pred_region
    _
  $region45: #{prithvi_vit_forward.1} parent=0 // pred_fallthru
    _

</llo_original>
